<compile_context>
chip_gen: v6e
topology: v6e:2x2x1
jax: 0.10.0
libtpu: 0.0.40
codegen_flags: <defaults>
</compile_context>

<pallas_src>
import functools

import numpy as np
import jax
import jax.numpy as jnp
from jax import lax
from jax.experimental import pallas as pl
from jax.experimental.pallas import tpu as pltpu


def hardswish(x):
    return x * jnp.clip(x + 3.0, 0.0, 6.0) * (1.0 / 6.0)


# ----------------------------- fused kernel ----------------------------------
def fused_ir_kernel(*refs, k, stride, H, W, Ho, Wo, NB, identity, use_se, use_hs):
    if stride != 1:
        (x_ref, w1_ref, dw_ref, mask_ref, pmid_ref,
         sew1_ref, seb1_ref, sew2_ref, w2_ref, pout_ref, sel_ref, o_ref) = refs
    else:
        (x_ref, w1_ref, dw_ref, mask_ref, pmid_ref,
         sew1_ref, seb1_ref, sew2_ref, w2_ref, pout_ref, o_ref) = refs
        sel_ref = None

    HW = H * W
    pad = (k - 1) // 2

    def act(v):  # Hardswish as mul/clip (VPU); never a divide
        if use_hs:
            return v * jnp.clip(v + 3.0, 0.0, 6.0) * (1.0 / 6.0)
        return jnp.maximum(v, 0.0)

    # ---- hoisted once per grid step (shared by all NB images in the block) ---
    w1 = w1_ref[...]                         # (Cmid, Cin)  bf16
    w2 = w2_ref[...]                         # (Cout, Cmid) bf16
    s1, b1 = pmid_ref[0], pmid_ref[1]        # (Cmid, 1) f32
    s2, b2 = pmid_ref[2], pmid_ref[3]
    se_b2 = pmid_ref[4]
    s3, b3 = pout_ref[0], pout_ref[1]        # (Cout, 1) f32
    taps = [(ki * k + kj, ki - pad, kj - pad) for ki in range(k) for kj in range(k)]
    tap_w = [dw_ref[t] for t, _, _ in taps]                      # each (Cmid, 1)
    tap_m = [None if (dh == 0 and dj == 0) else mask_ref[t]
             for t, dh, dj in taps]                              # each (1, HW)
    if use_se:
        se_w1 = sew1_ref[...]                # (Cred, Cmid) bf16
        se_b1 = seb1_ref[...]                # (Cred, 1)    f32
        se_w2 = sew2_ref[...]                # (Cmid, Cred) bf16
    if stride != 1:
        sel = sel_ref[...]                   # (HW, HWo) f32, 0/1 subsample matrix

    Cmid = w1.shape[0]

    for n in range(NB):                      # static unroll over the batch block
        # ---- Stage A: 1x1 expand (bf16 MXU, f32 acc) + folded BN1 + act ------
        xb = x_ref[n]                                               # (Cin, HW) bf16
        y = jnp.dot(w1, xb, preferred_element_type=jnp.float32)    # (Cmid, HW) f32
        y = act(y * s1 + b1)

        # ---- Stage B: depthwise kxk = k*k XLU lane-rolls + precomputed masks -
        acc = jnp.zeros((Cmid, HW), jnp.float32)
        for (t, dh, dj), wgt, msk in zip(taps, tap_w, tap_m):
            off = dh * W + dj
            tap = y if off == 0 else pltpu.roll(y, (-off) % HW, 1)
            if msk is None:                  # center tap: mask is all ones
                acc = acc + tap * wgt
            else:
                acc = acc + (tap * msk) * wgt

        if stride != 1:
            # exact strided subsample of the full-res conv (precomputed 0/1 matrix)
            acc = jnp.dot(acc, sel, preferred_element_type=jnp.float32)  # (Cmid, HWo)

        y2 = acc * s2 + b2                                          # folded BN2

        # ---- Squeeze-and-Excite (global avg pool + FC/ReLU/FC/sigmoid gate) --
        if use_se:
            pooled = jnp.mean(y2, axis=1, keepdims=True)            # (Cmid, 1) f32
            h1 = jnp.dot(se_w1, pooled.astype(jnp.bfloat16),
                         preferred_element_type=jnp.float32) + se_b1
            h1 = jnp.maximum(h1, 0.0)
            gate = jax.nn.sigmoid(
                jnp.dot(se_w2, h1.astype(jnp.bfloat16),
                        preferred_element_type=jnp.float32) + se_b2)
            y2 = y2 * gate
        y2 = act(y2)

        # ---- Stage C: 1x1 project (bf16 MXU) + folded BN3 (+ residual) -------
        z = jnp.dot(w2, y2.astype(jnp.bfloat16),
                    preferred_element_type=jnp.float32)             # (Cout, HWo)
        z = z * s3 + b3
        if identity:
            z = z + xb.astype(jnp.float32)
        o_ref[n] = z


# ------------------------------ wrapper helpers --------------------------------
def _pick_block_batch(N, Cmid, HW, budget_bytes=16 << 20):
    """Largest batch block that divides N and keeps the per-step working set small.
    For N <= 2 take the whole batch (amortize per-step overhead); otherwise keep
    at least two grid steps so v7x megacore can split the 'parallel' axis."""
    def fits(nb):
        return 8 * Cmid * HW * 4 * nb <= budget_bytes
    cap = N if N <= 2 else max(1, N // 2)
    best = 1
    for nb in range(1, cap + 1):
        if N % nb == 0 and fits(nb):
            best = nb
    return best


def _border_masks(k, H, W):
    """(k*k, 1, H*W) f32 validity masks for the lane-rolled depthwise taps."""
    pad = (k - 1) // 2
    q = np.arange(H * W)
    h, w = q // W, q % W
    m = np.zeros((k * k, 1, H * W), np.float32)
    for ki in range(k):
        for kj in range(k):
            dh, dj = ki - pad, kj - pad
            valid = ((h + dh >= 0) & (h + dh < H) &
                     (w + dj >= 0) & (w + dj < W))
            m[ki * k + kj, 0, :] = valid.astype(np.float32)
    return jnp.asarray(m)


def _stride_select_matrix(H, W, Ho, Wo, stride):
    """(H*W, Ho*Wo) 0/1 matrix: columns pick the strided spatial positions."""
    sel = np.zeros((H * W, Ho * Wo), np.float32)
    for ho in range(Ho):
        for wo in range(Wo):
            sel[(ho * stride) * W + wo * stride, ho * Wo + wo] = 1.0
    return jnp.asarray(sel)


# -------------------------------- wrapper --------------------------------------
def mobilenetv3_inverted_residual(x_nchw, params, *, kernel_size, stride,
                                  use_se=True, use_hs=True, block_batch=None):
    assert stride in (1, 2)
    N, Cin, H, W = x_nchw.shape
    Cmid = params["w1"].shape[0]
    Cout = params["w2"].shape[0]
    Cred = params["se_w1"].shape[0]
    identity = (stride == 1) and (Cin == Cout)
    k = kernel_size
    pad = (k - 1) // 2
    Ho = (H + 2 * pad - k) // stride + 1
    Wo = (W + 2 * pad - k) // stride + 1
    HW, HWo = H * W, Ho * Wo
    k2 = k * k

    NB = block_batch or _pick_block_batch(N, Cmid, HW)
    assert N % NB == 0
    G = N // NB

    # channels-on-sublanes / flat-spatial-on-lanes: free reshape of NCHW.
    # x stored bf16 (halves the dominant DMA); all elementwise math stays f32.
    x_flat = x_nchw.reshape(N, Cin, HW).astype(jnp.bfloat16)

    masks = _border_masks(k, H, W)                                    # (k2, 1, HW)
    dw_taps = jnp.transpose(params["dw"], (1, 0))[:, :, None].astype(jnp.float32)
    pmid = jnp.stack([params["bn1_scale"], params["bn1_bias"],
                      params["bn2_scale"], params["bn2_bias"],
                      params["se_b2"]], axis=0)                       # (5, Cmid, 1)
    pout = jnp.stack([params["bn3_scale"], params["bn3_bias"]], axis=0)  # (2, Cout, 1)

    args = [x_flat,
            params["w1"].astype(jnp.bfloat16),
            dw_taps, masks, pmid,
            params["se_w1"].astype(jnp.bfloat16), params["se_b1"],
            params["se_w2"].astype(jnp.bfloat16),
            params["w2"].astype(jnp.bfloat16), pout]

    def rep(shape):  # replicated (weight/constant) operand: same block every step
        return pl.BlockSpec(shape, lambda g, _s=shape: (0,) * len(_s))

    in_specs = [pl.BlockSpec((NB, Cin, HW), lambda g: (g, 0, 0)),     # x batch block
                rep((Cmid, Cin)),                                     # w1
                rep((k2, Cmid, 1)), rep((k2, 1, HW)),                 # dw taps, masks
                rep((5, Cmid, 1)),                                    # bn1/bn2/se_b2
                rep((Cred, Cmid)), rep((Cred, 1)),                    # SE fc1 w/b
                rep((Cmid, Cred)),                                    # SE fc2 w
                rep((Cout, Cmid)), rep((2, Cout, 1))]                 # w2, bn3

    if stride != 1:
        sel = _stride_select_matrix(H, W, Ho, Wo, stride)
        args.append(sel)
        in_specs.append(rep((HW, HWo)))

    kern = functools.partial(fused_ir_kernel, k=k, stride=stride, H=H, W=W,
                             Ho=Ho, Wo=Wo, NB=NB, identity=identity,
                             use_se=use_se, use_hs=use_hs)

    out = pl.pallas_call(
        kern,
        out_shape=jax.ShapeDtypeStruct((N, Cout, HWo), jnp.float32),
        grid=(G,),
        in_specs=in_specs,
        out_specs=pl.BlockSpec((NB, Cout, HWo), lambda g: (g, 0, 0)),
        compiler_params=pltpu.CompilerParams(
            dimension_semantics=("parallel",)),
    )(*args)

    return out.reshape(N, Cout, Ho, Wo)                              # NCHW, free reshape


# ------------------------- parameter construction ------------------------------
def _fold_bn(gamma, beta, mean, var, eps=1e-5):
    scale = gamma / jnp.sqrt(var + eps)
    bias = beta - mean * scale
    return scale[:, None], bias[:, None]          # (C, 1) for lane-broadcast


def make_params(key, inp, oup, hidden, kernel_size, reduction=4):
    ks = jax.random.split(key, 16)
    cred = hidden // reduction
    k2 = kernel_size * kernel_size

    def bn(i, c):
        gamma = 1.0 + 0.1 * jax.random.normal(ks[i], (c,))
        beta = 0.1 * jax.random.normal(ks[i + 1], (c,))
        mean = 0.05 * jax.random.normal(ks[i + 2], (c,))
        var = 1.0 + 0.1 * jnp.abs(jax.random.normal(ks[i + 3], (c,)))
        return _fold_bn(gamma, beta, mean, var)

    s1, b1 = bn(3, hidden)
    s2, b2 = bn(7, hidden)
    s3, b3 = bn(11, oup)
    return {
        # 1x1 expand: (Cmid, Cin)   == PyTorch weight (Cmid, Cin, 1, 1) squeezed
        "w1": 0.1 * jax.random.normal(ks[0], (hidden, inp), jnp.float32),
        # depthwise kxk: (Cmid, k*k) == PyTorch weight (Cmid, 1, k, k) flattened
        "dw": 0.1 * jax.random.normal(ks[1], (hidden, k2), jnp.float32),
        # 1x1 project: (Cout, Cmid)
        "w2": 0.1 * jax.random.normal(ks[2], (oup, hidden), jnp.float32),
        "bn1_scale": s1, "bn1_bias": b1,
        "bn2_scale": s2, "bn2_bias": b2,
        "bn3_scale": s3, "bn3_bias": b3,
        # SE block (1x1 convs == dense layers on the pooled vector)
        "se_w1": 0.1 * jax.random.normal(ks[15], (cred, hidden), jnp.float32),
        "se_b1": 0.05 * jax.random.normal(ks[14], (cred, 1), jnp.float32),
        "se_w2": 0.1 * jax.random.normal(ks[13], (hidden, cred), jnp.float32),
        "se_b2": 0.05 * jax.random.normal(ks[12], (hidden, 1), jnp.float32),
    }


# ------------------------------ pure-JAX reference ------------------------------
# Mirrors the kernel's bf16 matmul operands (f32 accumulate) so tolerances stay tight.
def reference(x_nchw, params, *, kernel_size, stride):
    f32, bf16 = jnp.float32, jnp.bfloat16
    x = jnp.transpose(x_nchw, (0, 2, 3, 1)).astype(bf16).astype(f32)   # NHWC, bf16-rounded
    Cin = x.shape[-1]
    Cmid = params["w1"].shape[0]
    Cout = params["w2"].shape[0]
    identity = (stride == 1) and (Cin == Cout)
    k = kernel_size
    pad = (k - 1) // 2

    y = jnp.einsum("nhwc,dc->nhwd", x.astype(bf16), params["w1"].astype(bf16),
                   preferred_element_type=f32)
    y = hardswish(y * params["bn1_scale"][:, 0] + params["bn1_bias"][:, 0])

    dw = jnp.transpose(params["dw"], (1, 0)).reshape(k, k, Cmid)[:, :, None, :]
    y = lax.conv_general_dilated(
        y, dw, (stride, stride), [(pad, pad), (pad, pad)],
        dimension_numbers=("NHWC", "HWIO", "NHWC"),
        feature_group_count=Cmid)
    y = y * params["bn2_scale"][:, 0] + params["bn2_bias"][:, 0]

    pooled = jnp.mean(y, axis=(1, 2))                                  # (N, Cmid)
    h = jnp.einsum("nc,rc->nr", pooled.astype(bf16), params["se_w1"].astype(bf16),
                   preferred_element_type=f32) + params["se_b1"][:, 0]
    h = jnp.maximum(h, 0.0)
    s = jax.nn.sigmoid(
        jnp.einsum("nr,cr->nc", h.astype(bf16), params["se_w2"].astype(bf16),
                   preferred_element_type=f32) + params["se_b2"][:, 0])
    y = hardswish(y * s[:, None, None, :])

    z = jnp.einsum("nhwd,od->nhwo", y.astype(bf16), params["w2"].astype(bf16),
                   preferred_element_type=f32)
    z = z * params["bn3_scale"][:, 0] + params["bn3_bias"][:, 0]
    if identity:
        z = z + x
    return jnp.transpose(z, (0, 3, 1, 2))


if __name__ == "__main__":
    # MobileNetV3_InvertedResidual(inp=16, oup=16, hidden_dim=32, kernel_size=3,
    #                              stride=1/2, use_se=True, use_hs=True)
    N, INP, OUP, HID, K = 2, 16, 16, 32, 3
    H = W = 16

    key = jax.random.PRNGKey(0)
    kx, kp = jax.random.split(key)
    x = jax.random.normal(kx, (N, INP, H, W), jnp.float32)        # NCHW like PyTorch
    params = make_params(kp, INP, OUP, HID, K)

    # stride=1 (residual) configuration
    out1 = jax.block_until_ready(
        mobilenetv3_inverted_residual(x, params, kernel_size=K, stride=1))
    ref1 = reference(x, params, kernel_size=K, stride=1)
    assert out1.shape == (N, OUP, H, W)
    err1 = float(jnp.max(jnp.abs(out1 - ref1)))
    assert jnp.allclose(out1, ref1, atol=1e-2, rtol=1e-2), err1

    # stride=2 (downsampling, no residual) configuration
    out2 = jax.block_until_ready(
        mobilenetv3_inverted_residual(x, params, kernel_size=K, stride=2))
    ref2 = reference(x, params, kernel_size=K, stride=2)
    assert out2.shape == (N, OUP, H // 2, W // 2)
    err2 = float(jnp.max(jnp.abs(out2 - ref2)))
    assert jnp.allclose(out2, ref2, atol=1e-2, rtol=1e-2), err2

    print("KERNEL_OK")
</pallas_src>

<mosaic_0001>
module attributes {stable_mosaic.version = 11 : i64} {
  func.func @fused_ir_kernel(%arg0: i32, %arg1: memref<2x16x256xbf16, #tpu.memory_space<vmem>>, %arg2: memref<32x16xbf16, #tpu.memory_space<vmem>>, %arg3: memref<9x32x1xf32, #tpu.memory_space<vmem>>, %arg4: memref<9x1x256xf32, #tpu.memory_space<vmem>>, %arg5: memref<5x32x1xf32, #tpu.memory_space<vmem>>, %arg6: memref<8x32xbf16, #tpu.memory_space<vmem>>, %arg7: memref<8x1xf32, #tpu.memory_space<vmem>>, %arg8: memref<32x8xbf16, #tpu.memory_space<vmem>>, %arg9: memref<16x32xbf16, #tpu.memory_space<vmem>>, %arg10: memref<2x16x1xf32, #tpu.memory_space<vmem>>, %arg11: memref<2x16x256xf32, #tpu.memory_space<vmem>>) attributes {dimension_semantics = [#tpu.dimension_semantics<parallel>], iteration_bounds = array<i64: 1>, scalar_prefetch = 0 : i64, scratch_operands = 0 : i64, tpu.core_type = #tpu.core_type<tc>, window_params = [{transform_indices = @transform_0, window_bounds = array<i64: 2, 16, 256>}, {pipeline_mode = #tpu.pipeline_mode<synchronous>, transform_indices = @transform_1, window_bounds = array<i64: 32, 16>}, {pipeline_mode = #tpu.pipeline_mode<synchronous>, transform_indices = @transform_2, window_bounds = array<i64: 9, 32, 1>}, {pipeline_mode = #tpu.pipeline_mode<synchronous>, transform_indices = @transform_3, window_bounds = array<i64: 9, 1, 256>}, {pipeline_mode = #tpu.pipeline_mode<synchronous>, transform_indices = @transform_4, window_bounds = array<i64: 5, 32, 1>}, {pipeline_mode = #tpu.pipeline_mode<synchronous>, transform_indices = @transform_5, window_bounds = array<i64: 8, 32>}, {pipeline_mode = #tpu.pipeline_mode<synchronous>, transform_indices = @transform_6, window_bounds = array<i64: 8, 1>}, {pipeline_mode = #tpu.pipeline_mode<synchronous>, transform_indices = @transform_7, window_bounds = array<i64: 32, 8>}, {pipeline_mode = #tpu.pipeline_mode<synchronous>, transform_indices = @transform_8, window_bounds = array<i64: 16, 32>}, {pipeline_mode = #tpu.pipeline_mode<synchronous>, transform_indices = @transform_9, window_bounds = array<i64: 2, 16, 1>}, {transform_indices = @transform_10, window_bounds = array<i64: 2, 16, 256>}]} {
    %c0 = arith.constant 0 : index
    %c0_0 = arith.constant 0 : index
    %0 = vector.load %arg2[%c0, %c0_0] : memref<32x16xbf16, #tpu.memory_space<vmem>>, vector<32x16xbf16>
    %c0_1 = arith.constant 0 : index
    %c0_2 = arith.constant 0 : index
    %1 = vector.load %arg9[%c0_1, %c0_2] : memref<16x32xbf16, #tpu.memory_space<vmem>>, vector<16x32xbf16>
    %c0_3 = arith.constant 0 : index
    %c0_4 = arith.constant 0 : index
    %c0_5 = arith.constant 0 : index
    %2 = vector.load %arg5[%c0_3, %c0_4, %c0_5] : memref<5x32x1xf32, #tpu.memory_space<vmem>>, vector<1x32x1xf32>
    %3 = vector.shape_cast %2 : vector<1x32x1xf32> to vector<32x1xf32>
    %c1 = arith.constant 1 : index
    %c0_6 = arith.constant 0 : index
    %c0_7 = arith.constant 0 : index
    %4 = vector.load %arg5[%c1, %c0_6, %c0_7] : memref<5x32x1xf32, #tpu.memory_space<vmem>>, vector<1x32x1xf32>
    %5 = vector.shape_cast %4 : vector<1x32x1xf32> to vector<32x1xf32>
    %c2 = arith.constant 2 : index
    %c0_8 = arith.constant 0 : index
    %c0_9 = arith.constant 0 : index
    %6 = vector.load %arg5[%c2, %c0_8, %c0_9] : memref<5x32x1xf32, #tpu.memory_space<vmem>>, vector<1x32x1xf32>
    %7 = vector.shape_cast %6 : vector<1x32x1xf32> to vector<32x1xf32>
    %c3 = arith.constant 3 : index
    %c0_10 = arith.constant 0 : index
    %c0_11 = arith.constant 0 : index
    %8 = vector.load %arg5[%c3, %c0_10, %c0_11] : memref<5x32x1xf32, #tpu.memory_space<vmem>>, vector<1x32x1xf32>
    %9 = vector.shape_cast %8 : vector<1x32x1xf32> to vector<32x1xf32>
    %c4 = arith.constant 4 : index
    %c0_12 = arith.constant 0 : index
    %c0_13 = arith.constant 0 : index
    %10 = vector.load %arg5[%c4, %c0_12, %c0_13] : memref<5x32x1xf32, #tpu.memory_space<vmem>>, vector<1x32x1xf32>
    %11 = vector.shape_cast %10 : vector<1x32x1xf32> to vector<32x1xf32>
    %c0_14 = arith.constant 0 : index
    %c0_15 = arith.constant 0 : index
    %c0_16 = arith.constant 0 : index
    %12 = vector.load %arg10[%c0_14, %c0_15, %c0_16] : memref<2x16x1xf32, #tpu.memory_space<vmem>>, vector<1x16x1xf32>
    %13 = vector.shape_cast %12 : vector<1x16x1xf32> to vector<16x1xf32>
    %c1_17 = arith.constant 1 : index
    %c0_18 = arith.constant 0 : index
    %c0_19 = arith.constant 0 : index
    %14 = vector.load %arg10[%c1_17, %c0_18, %c0_19] : memref<2x16x1xf32, #tpu.memory_space<vmem>>, vector<1x16x1xf32>
    %15 = vector.shape_cast %14 : vector<1x16x1xf32> to vector<16x1xf32>
    %c0_20 = arith.constant 0 : index
    %c0_21 = arith.constant 0 : index
    %c0_22 = arith.constant 0 : index
    %16 = vector.load %arg3[%c0_20, %c0_21, %c0_22] : memref<9x32x1xf32, #tpu.memory_space<vmem>>, vector<1x32x1xf32>
    %17 = vector.shape_cast %16 : vector<1x32x1xf32> to vector<32x1xf32>
    %c1_23 = arith.constant 1 : index
    %c0_24 = arith.constant 0 : index
    %c0_25 = arith.constant 0 : index
    %18 = vector.load %arg3[%c1_23, %c0_24, %c0_25] : memref<9x32x1xf32, #tpu.memory_space<vmem>>, vector<1x32x1xf32>
    %19 = vector.shape_cast %18 : vector<1x32x1xf32> to vector<32x1xf32>
    %c2_26 = arith.constant 2 : index
    %c0_27 = arith.constant 0 : index
    %c0_28 = arith.constant 0 : index
    %20 = vector.load %arg3[%c2_26, %c0_27, %c0_28] : memref<9x32x1xf32, #tpu.memory_space<vmem>>, vector<1x32x1xf32>
    %21 = vector.shape_cast %20 : vector<1x32x1xf32> to vector<32x1xf32>
    %c3_29 = arith.constant 3 : index
    %c0_30 = arith.constant 0 : index
    %c0_31 = arith.constant 0 : index
    %22 = vector.load %arg3[%c3_29, %c0_30, %c0_31] : memref<9x32x1xf32, #tpu.memory_space<vmem>>, vector<1x32x1xf32>
    %23 = vector.shape_cast %22 : vector<1x32x1xf32> to vector<32x1xf32>
    %c4_32 = arith.constant 4 : index
    %c0_33 = arith.constant 0 : index
    %c0_34 = arith.constant 0 : index
    %24 = vector.load %arg3[%c4_32, %c0_33, %c0_34] : memref<9x32x1xf32, #tpu.memory_space<vmem>>, vector<1x32x1xf32>
    %25 = vector.shape_cast %24 : vector<1x32x1xf32> to vector<32x1xf32>
    %c5 = arith.constant 5 : index
    %c0_35 = arith.constant 0 : index
    %c0_36 = arith.constant 0 : index
    %26 = vector.load %arg3[%c5, %c0_35, %c0_36] : memref<9x32x1xf32, #tpu.memory_space<vmem>>, vector<1x32x1xf32>
    %27 = vector.shape_cast %26 : vector<1x32x1xf32> to vector<32x1xf32>
    %c6 = arith.constant 6 : index
    %c0_37 = arith.constant 0 : index
    %c0_38 = arith.constant 0 : index
    %28 = vector.load %arg3[%c6, %c0_37, %c0_38] : memref<9x32x1xf32, #tpu.memory_space<vmem>>, vector<1x32x1xf32>
    %29 = vector.shape_cast %28 : vector<1x32x1xf32> to vector<32x1xf32>
    %c7 = arith.constant 7 : index
    %c0_39 = arith.constant 0 : index
    %c0_40 = arith.constant 0 : index
    %30 = vector.load %arg3[%c7, %c0_39, %c0_40] : memref<9x32x1xf32, #tpu.memory_space<vmem>>, vector<1x32x1xf32>
    %31 = vector.shape_cast %30 : vector<1x32x1xf32> to vector<32x1xf32>
    %c8 = arith.constant 8 : index
    %c0_41 = arith.constant 0 : index
    %c0_42 = arith.constant 0 : index
    %32 = vector.load %arg3[%c8, %c0_41, %c0_42] : memref<9x32x1xf32, #tpu.memory_space<vmem>>, vector<1x32x1xf32>
    %33 = vector.shape_cast %32 : vector<1x32x1xf32> to vector<32x1xf32>
    %c0_43 = arith.constant 0 : index
    %c0_44 = arith.constant 0 : index
    %c0_45 = arith.constant 0 : index
    %34 = vector.load %arg4[%c0_43, %c0_44, %c0_45] : memref<9x1x256xf32, #tpu.memory_space<vmem>>, vector<1x1x256xf32>
    %35 = vector.shape_cast %34 : vector<1x1x256xf32> to vector<1x256xf32>
    %c1_46 = arith.constant 1 : index
    %c0_47 = arith.constant 0 : index
    %c0_48 = arith.constant 0 : index
    %36 = vector.load %arg4[%c1_46, %c0_47, %c0_48] : memref<9x1x256xf32, #tpu.memory_space<vmem>>, vector<1x1x256xf32>
    %37 = vector.shape_cast %36 : vector<1x1x256xf32> to vector<1x256xf32>
    %c2_49 = arith.constant 2 : index
    %c0_50 = arith.constant 0 : index
    %c0_51 = arith.constant 0 : index
    %38 = vector.load %arg4[%c2_49, %c0_50, %c0_51] : memref<9x1x256xf32, #tpu.memory_space<vmem>>, vector<1x1x256xf32>
    %39 = vector.shape_cast %38 : vector<1x1x256xf32> to vector<1x256xf32>
    %c3_52 = arith.constant 3 : index
    %c0_53 = arith.constant 0 : index
    %c0_54 = arith.constant 0 : index
    %40 = vector.load %arg4[%c3_52, %c0_53, %c0_54] : memref<9x1x256xf32, #tpu.memory_space<vmem>>, vector<1x1x256xf32>
    %41 = vector.shape_cast %40 : vector<1x1x256xf32> to vector<1x256xf32>
    %c5_55 = arith.constant 5 : index
    %c0_56 = arith.constant 0 : index
    %c0_57 = arith.constant 0 : index
    %42 = vector.load %arg4[%c5_55, %c0_56, %c0_57] : memref<9x1x256xf32, #tpu.memory_space<vmem>>, vector<1x1x256xf32>
    %43 = vector.shape_cast %42 : vector<1x1x256xf32> to vector<1x256xf32>
    %c6_58 = arith.constant 6 : index
    %c0_59 = arith.constant 0 : index
    %c0_60 = arith.constant 0 : index
    %44 = vector.load %arg4[%c6_58, %c0_59, %c0_60] : memref<9x1x256xf32, #tpu.memory_space<vmem>>, vector<1x1x256xf32>
    %45 = vector.shape_cast %44 : vector<1x1x256xf32> to vector<1x256xf32>
    %c7_61 = arith.constant 7 : index
    %c0_62 = arith.constant 0 : index
    %c0_63 = arith.constant 0 : index
    %46 = vector.load %arg4[%c7_61, %c0_62, %c0_63] : memref<9x1x256xf32, #tpu.memory_space<vmem>>, vector<1x1x256xf32>
    %47 = vector.shape_cast %46 : vector<1x1x256xf32> to vector<1x256xf32>
    %c8_64 = arith.constant 8 : index
    %c0_65 = arith.constant 0 : index
    %c0_66 = arith.constant 0 : index
    %48 = vector.load %arg4[%c8_64, %c0_65, %c0_66] : memref<9x1x256xf32, #tpu.memory_space<vmem>>, vector<1x1x256xf32>
    %49 = vector.shape_cast %48 : vector<1x1x256xf32> to vector<1x256xf32>
    %c0_67 = arith.constant 0 : index
    %c0_68 = arith.constant 0 : index
    %50 = vector.load %arg6[%c0_67, %c0_68] : memref<8x32xbf16, #tpu.memory_space<vmem>>, vector<8x32xbf16>
    %c0_69 = arith.constant 0 : index
    %c0_70 = arith.constant 0 : index
    %51 = vector.load %arg7[%c0_69, %c0_70] : memref<8x1xf32, #tpu.memory_space<vmem>>, vector<8x1xf32>
    %c0_71 = arith.constant 0 : index
    %c0_72 = arith.constant 0 : index
    %52 = vector.load %arg8[%c0_71, %c0_72] : memref<32x8xbf16, #tpu.memory_space<vmem>>, vector<32x8xbf16>
    %c0_73 = arith.constant 0 : index
    %c0_74 = arith.constant 0 : index
    %c0_75 = arith.constant 0 : index
    %53 = vector.load %arg1[%c0_73, %c0_74, %c0_75] : memref<2x16x256xbf16, #tpu.memory_space<vmem>>, vector<1x16x256xbf16>
    %54 = vector.shape_cast %53 : vector<1x16x256xbf16> to vector<16x256xbf16>
    %cst = arith.constant dense<0.000000e+00> : vector<32x256xf32>
    %55 = tpu.matmul %0, %54, %cst {dimension_numbers = #tpu.dot_dimension_numbers<[1], [0], [0], [1], [0, 0, 1, 1], [], []>} : vector<32x16xbf16>, vector<16x256xbf16>, vector<32x256xf32> -> vector<32x256xf32>
    %56 = vector.broadcast %3 : vector<32x1xf32> to vector<32x256xf32>
    %57 = arith.mulf %55, %56 : vector<32x256xf32>
    %58 = vector.broadcast %5 : vector<32x1xf32> to vector<32x256xf32>
    %59 = arith.addf %57, %58 : vector<32x256xf32>
    %cst_76 = arith.constant 3.000000e+00 : f32
    %60 = vector.broadcast %cst_76 : f32 to vector<32x256xf32>
    %61 = arith.addf %59, %60 : vector<32x256xf32>
    %cst_77 = arith.constant 0.000000e+00 : f32
    %cst_78 = arith.constant 6.000000e+00 : f32
    %62 = vector.broadcast %cst_77 : f32 to vector<32x256xf32>
    %63 = arith.maximumf %62, %61 : vector<32x256xf32>
    %64 = vector.broadcast %cst_78 : f32 to vector<32x256xf32>
    %65 = arith.minimumf %64, %63 : vector<32x256xf32>
    %66 = arith.mulf %59, %65 : vector<32x256xf32>
    %cst_79 = arith.constant 0.166666672 : f32
    %67 = vector.broadcast %cst_79 : f32 to vector<32x256xf32>
    %68 = arith.mulf %66, %67 : vector<32x256xf32>
    %cst_80 = arith.constant 0.000000e+00 : f32
    %69 = vector.broadcast %cst_80 : f32 to vector<32x256xf32>
    %c17_i32 = arith.constant 17 : i32
    %70 = tpu.dynamic_rotate %68 by %c17_i32 dim 1 : vector<32x256xf32>, i32 -> vector<32x256xf32>
    %71 = vector.broadcast %35 : vector<1x256xf32> to vector<32x256xf32>
    %72 = arith.mulf %70, %71 : vector<32x256xf32>
    %73 = vector.broadcast %17 : vector<32x1xf32> to vector<32x256xf32>
    %74 = arith.mulf %72, %73 : vector<32x256xf32>
    %75 = arith.addf %69, %74 : vector<32x256xf32>
    %c16_i32 = arith.constant 16 : i32
    %76 = tpu.dynamic_rotate %68 by %c16_i32 dim 1 : vector<32x256xf32>, i32 -> vector<32x256xf32>
    %77 = vector.broadcast %37 : vector<1x256xf32> to vector<32x256xf32>
    %78 = arith.mulf %76, %77 : vector<32x256xf32>
    %79 = vector.broadcast %19 : vector<32x1xf32> to vector<32x256xf32>
    %80 = arith.mulf %78, %79 : vector<32x256xf32>
    %81 = arith.addf %75, %80 : vector<32x256xf32>
    %c15_i32 = arith.constant 15 : i32
    %82 = tpu.dynamic_rotate %68 by %c15_i32 dim 1 : vector<32x256xf32>, i32 -> vector<32x256xf32>
    %83 = vector.broadcast %39 : vector<1x256xf32> to vector<32x256xf32>
    %84 = arith.mulf %82, %83 : vector<32x256xf32>
    %85 = vector.broadcast %21 : vector<32x1xf32> to vector<32x256xf32>
    %86 = arith.mulf %84, %85 : vector<32x256xf32>
    %87 = arith.addf %81, %86 : vector<32x256xf32>
    %c1_i32 = arith.constant 1 : i32
    %88 = tpu.dynamic_rotate %68 by %c1_i32 dim 1 : vector<32x256xf32>, i32 -> vector<32x256xf32>
    %89 = vector.broadcast %41 : vector<1x256xf32> to vector<32x256xf32>
    %90 = arith.mulf %88, %89 : vector<32x256xf32>
    %91 = vector.broadcast %23 : vector<32x1xf32> to vector<32x256xf32>
    %92 = arith.mulf %90, %91 : vector<32x256xf32>
    %93 = arith.addf %87, %92 : vector<32x256xf32>
    %94 = vector.broadcast %25 : vector<32x1xf32> to vector<32x256xf32>
    %95 = arith.mulf %68, %94 : vector<32x256xf32>
    %96 = arith.addf %93, %95 : vector<32x256xf32>
    %c255_i32 = arith.constant 255 : i32
    %97 = tpu.dynamic_rotate %68 by %c255_i32 dim 1 : vector<32x256xf32>, i32 -> vector<32x256xf32>
    %98 = vector.broadcast %43 : vector<1x256xf32> to vector<32x256xf32>
    %99 = arith.mulf %97, %98 : vector<32x256xf32>
    %100 = vector.broadcast %27 : vector<32x1xf32> to vector<32x256xf32>
    %101 = arith.mulf %99, %100 : vector<32x256xf32>
    %102 = arith.addf %96, %101 : vector<32x256xf32>
    %c241_i32 = arith.constant 241 : i32
    %103 = tpu.dynamic_rotate %68 by %c241_i32 dim 1 : vector<32x256xf32>, i32 -> vector<32x256xf32>
    %104 = vector.broadcast %45 : vector<1x256xf32> to vector<32x256xf32>
    %105 = arith.mulf %103, %104 : vector<32x256xf32>
    %106 = vector.broadcast %29 : vector<32x1xf32> to vector<32x256xf32>
    %107 = arith.mulf %105, %106 : vector<32x256xf32>
    %108 = arith.addf %102, %107 : vector<32x256xf32>
    %c240_i32 = arith.constant 240 : i32
    %109 = tpu.dynamic_rotate %68 by %c240_i32 dim 1 : vector<32x256xf32>, i32 -> vector<32x256xf32>
    %110 = vector.broadcast %47 : vector<1x256xf32> to vector<32x256xf32>
    %111 = arith.mulf %109, %110 : vector<32x256xf32>
    %112 = vector.broadcast %31 : vector<32x1xf32> to vector<32x256xf32>
    %113 = arith.mulf %111, %112 : vector<32x256xf32>
    %114 = arith.addf %108, %113 : vector<32x256xf32>
    %c239_i32 = arith.constant 239 : i32
    %115 = tpu.dynamic_rotate %68 by %c239_i32 dim 1 : vector<32x256xf32>, i32 -> vector<32x256xf32>
    %116 = vector.broadcast %49 : vector<1x256xf32> to vector<32x256xf32>
    %117 = arith.mulf %115, %116 : vector<32x256xf32>
    %118 = vector.broadcast %33 : vector<32x1xf32> to vector<32x256xf32>
    %119 = arith.mulf %117, %118 : vector<32x256xf32>
    %120 = arith.addf %114, %119 : vector<32x256xf32>
    %121 = vector.broadcast %7 : vector<32x1xf32> to vector<32x256xf32>
    %122 = arith.mulf %120, %121 : vector<32x256xf32>
    %123 = vector.broadcast %9 : vector<32x1xf32> to vector<32x256xf32>
    %124 = arith.addf %122, %123 : vector<32x256xf32>
    %cst_81 = arith.constant dense<0.000000e+00> : vector<32xf32>
    %125 = vector.multi_reduction <add>, %124, %cst_81 [1] : vector<32x256xf32> to vector<32xf32>
    %126 = vector.shape_cast %125 : vector<32xf32> to vector<32x1xf32>
    %cst_82 = arith.constant 2.560000e+02 : f32
    %127 = vector.broadcast %cst_82 : f32 to vector<32x1xf32>
    %128 = arith.divf %126, %127 : vector<32x1xf32>
    %129 = arith.truncf %128 : vector<32x1xf32> to vector<32x1xbf16>
    %cst_83 = arith.constant dense<0.000000e+00> : vector<8x1xf32>
    %130 = tpu.matmul %50, %129, %cst_83 {dimension_numbers = #tpu.dot_dimension_numbers<[1], [0], [0], [1], [0, 0, 1, 1], [], []>} : vector<8x32xbf16>, vector<32x1xbf16>, vector<8x1xf32> -> vector<8x1xf32>
    %131 = arith.addf %130, %51 : vector<8x1xf32>
    %cst_84 = arith.constant 0.000000e+00 : f32
    %132 = vector.broadcast %cst_84 : f32 to vector<8x1xf32>
    %133 = arith.maximumf %131, %132 : vector<8x1xf32>
    %134 = arith.truncf %133 : vector<8x1xf32> to vector<8x1xbf16>
    %cst_85 = arith.constant dense<0.000000e+00> : vector<32x1xf32>
    %135 = tpu.matmul %52, %134, %cst_85 {dimension_numbers = #tpu.dot_dimension_numbers<[1], [0], [0], [1], [0, 0, 1, 1], [], []>} : vector<32x8xbf16>, vector<8x1xbf16>, vector<32x1xf32> -> vector<32x1xf32>
    %136 = arith.addf %135, %11 : vector<32x1xf32>
    %137 = arith.negf %136 : vector<32x1xf32>
    %138 = math.exp %137 : vector<32x1xf32>
    %cst_86 = arith.constant 1.000000e+00 : f32
    %139 = vector.broadcast %cst_86 : f32 to vector<32x1xf32>
    %140 = arith.addf %139, %138 : vector<32x1xf32>
    %141 = arith.divf %139, %140 : vector<32x1xf32>
    %142 = vector.broadcast %141 : vector<32x1xf32> to vector<32x256xf32>
    %143 = arith.mulf %124, %142 : vector<32x256xf32>
    %cst_87 = arith.constant 3.000000e+00 : f32
    %144 = vector.broadcast %cst_87 : f32 to vector<32x256xf32>
    %145 = arith.addf %143, %144 : vector<32x256xf32>
    %cst_88 = arith.constant 0.000000e+00 : f32
    %cst_89 = arith.constant 6.000000e+00 : f32
    %146 = vector.broadcast %cst_88 : f32 to vector<32x256xf32>
    %147 = arith.maximumf %146, %145 : vector<32x256xf32>
    %148 = vector.broadcast %cst_89 : f32 to vector<32x256xf32>
    %149 = arith.minimumf %148, %147 : vector<32x256xf32>
    %150 = arith.mulf %143, %149 : vector<32x256xf32>
    %cst_90 = arith.constant 0.166666672 : f32
    %151 = vector.broadcast %cst_90 : f32 to vector<32x256xf32>
    %152 = arith.mulf %150, %151 : vector<32x256xf32>
    %153 = arith.truncf %152 : vector<32x256xf32> to vector<32x256xbf16>
    %cst_91 = arith.constant dense<0.000000e+00> : vector<16x256xf32>
    %154 = tpu.matmul %1, %153, %cst_91 {dimension_numbers = #tpu.dot_dimension_numbers<[1], [0], [0], [1], [0, 0, 1, 1], [], []>} : vector<16x32xbf16>, vector<32x256xbf16>, vector<16x256xf32> -> vector<16x256xf32>
    %155 = vector.broadcast %13 : vector<16x1xf32> to vector<16x256xf32>
    %156 = arith.mulf %154, %155 : vector<16x256xf32>
    %157 = vector.broadcast %15 : vector<16x1xf32> to vector<16x256xf32>
    %158 = arith.addf %156, %157 : vector<16x256xf32>
    %159 = arith.extf %54 : vector<16x256xbf16> to vector<16x256xf32>
    %160 = arith.addf %158, %159 : vector<16x256xf32>
    %c0_92 = arith.constant 0 : index
    %c0_93 = arith.constant 0 : index
    %c0_94 = arith.constant 0 : index
    %161 = vector.load %arg11[%c0_92, %c0_93, %c0_94] : memref<2x16x256xf32, #tpu.memory_space<vmem>>, vector<1x16x256xf32>
    %162 = vector.shape_cast %161 : vector<1x16x256xf32> to vector<16x256xf32>
    %163 = vector.shape_cast %160 : vector<16x256xf32> to vector<1x16x256xf32>
    tpu.vector_store %arg11[%c0_92, %c0_93, %c0_94], %163 {strides = array<i32>} : memref<2x16x256xf32, #tpu.memory_space<vmem>>, vector<1x16x256xf32>,
    %c1_95 = arith.constant 1 : index
    %c0_96 = arith.constant 0 : index
    %c0_97 = arith.constant 0 : index
    %164 = vector.load %arg1[%c1_95, %c0_96, %c0_97] : memref<2x16x256xbf16, #tpu.memory_space<vmem>>, vector<1x16x256xbf16>
    %165 = vector.shape_cast %164 : vector<1x16x256xbf16> to vector<16x256xbf16>
    %cst_98 = arith.constant dense<0.000000e+00> : vector<32x256xf32>
    %166 = tpu.matmul %0, %165, %cst_98 {dimension_numbers = #tpu.dot_dimension_numbers<[1], [0], [0], [1], [0, 0, 1, 1], [], []>} : vector<32x16xbf16>, vector<16x256xbf16>, vector<32x256xf32> -> vector<32x256xf32>
    %167 = vector.broadcast %3 : vector<32x1xf32> to vector<32x256xf32>
    %168 = arith.mulf %166, %167 : vector<32x256xf32>
    %169 = vector.broadcast %5 : vector<32x1xf32> to vector<32x256xf32>
    %170 = arith.addf %168, %169 : vector<32x256xf32>
    %cst_99 = arith.constant 3.000000e+00 : f32
    %171 = vector.broadcast %cst_99 : f32 to vector<32x256xf32>
    %172 = arith.addf %170, %171 : vector<32x256xf32>
    %cst_100 = arith.constant 0.000000e+00 : f32
    %cst_101 = arith.constant 6.000000e+00 : f32
    %173 = vector.broadcast %cst_100 : f32 to vector<32x256xf32>
    %174 = arith.maximumf %173, %172 : vector<32x256xf32>
    %175 = vector.broadcast %cst_101 : f32 to vector<32x256xf32>
    %176 = arith.minimumf %175, %174 : vector<32x256xf32>
    %177 = arith.mulf %170, %176 : vector<32x256xf32>
    %cst_102 = arith.constant 0.166666672 : f32
    %178 = vector.broadcast %cst_102 : f32 to vector<32x256xf32>
    %179 = arith.mulf %177, %178 : vector<32x256xf32>
    %cst_103 = arith.constant 0.000000e+00 : f32
    %180 = vector.broadcast %cst_103 : f32 to vector<32x256xf32>
    %c17_i32_104 = arith.constant 17 : i32
    %181 = tpu.dynamic_rotate %179 by %c17_i32_104 dim 1 : vector<32x256xf32>, i32 -> vector<32x256xf32>
    %182 = vector.broadcast %35 : vector<1x256xf32> to vector<32x256xf32>
    %183 = arith.mulf %181, %182 : vector<32x256xf32>
    %184 = vector.broadcast %17 : vector<32x1xf32> to vector<32x256xf32>
    %185 = arith.mulf %183, %184 : vector<32x256xf32>
    %186 = arith.addf %180, %185 : vector<32x256xf32>
    %c16_i32_105 = arith.constant 16 : i32
    %187 = tpu.dynamic_rotate %179 by %c16_i32_105 dim 1 : vector<32x256xf32>, i32 -> vector<32x256xf32>
    %188 = vector.broadcast %37 : vector<1x256xf32> to vector<32x256xf32>
    %189 = arith.mulf %187, %188 : vector<32x256xf32>
    %190 = vector.broadcast %19 : vector<32x1xf32> to vector<32x256xf32>
    %191 = arith.mulf %189, %190 : vector<32x256xf32>
    %192 = arith.addf %186, %191 : vector<32x256xf32>
    %c15_i32_106 = arith.constant 15 : i32
    %193 = tpu.dynamic_rotate %179 by %c15_i32_106 dim 1 : vector<32x256xf32>, i32 -> vector<32x256xf32>
    %194 = vector.broadcast %39 : vector<1x256xf32> to vector<32x256xf32>
    %195 = arith.mulf %193, %194 : vector<32x256xf32>
    %196 = vector.broadcast %21 : vector<32x1xf32> to vector<32x256xf32>
    %197 = arith.mulf %195, %196 : vector<32x256xf32>
    %198 = arith.addf %192, %197 : vector<32x256xf32>
    %c1_i32_107 = arith.constant 1 : i32
    %199 = tpu.dynamic_rotate %179 by %c1_i32_107 dim 1 : vector<32x256xf32>, i32 -> vector<32x256xf32>
    %200 = vector.broadcast %41 : vector<1x256xf32> to vector<32x256xf32>
    %201 = arith.mulf %199, %200 : vector<32x256xf32>
    %202 = vector.broadcast %23 : vector<32x1xf32> to vector<32x256xf32>
    %203 = arith.mulf %201, %202 : vector<32x256xf32>
    %204 = arith.addf %198, %203 : vector<32x256xf32>
    %205 = vector.broadcast %25 : vector<32x1xf32> to vector<32x256xf32>
    %206 = arith.mulf %179, %205 : vector<32x256xf32>
    %207 = arith.addf %204, %206 : vector<32x256xf32>
    %c255_i32_108 = arith.constant 255 : i32
    %208 = tpu.dynamic_rotate %179 by %c255_i32_108 dim 1 : vector<32x256xf32>, i32 -> vector<32x256xf32>
    %209 = vector.broadcast %43 : vector<1x256xf32> to vector<32x256xf32>
    %210 = arith.mulf %208, %209 : vector<32x256xf32>
    %211 = vector.broadcast %27 : vector<32x1xf32> to vector<32x256xf32>
    %212 = arith.mulf %210, %211 : vector<32x256xf32>
    %213 = arith.addf %207, %212 : vector<32x256xf32>
    %c241_i32_109 = arith.constant 241 : i32
    %214 = tpu.dynamic_rotate %179 by %c241_i32_109 dim 1 : vector<32x256xf32>, i32 -> vector<32x256xf32>
    %215 = vector.broadcast %45 : vector<1x256xf32> to vector<32x256xf32>
    %216 = arith.mulf %214, %215 : vector<32x256xf32>
    %217 = vector.broadcast %29 : vector<32x1xf32> to vector<32x256xf32>
    %218 = arith.mulf %216, %217 : vector<32x256xf32>
    %219 = arith.addf %213, %218 : vector<32x256xf32>
    %c240_i32_110 = arith.constant 240 : i32
    %220 = tpu.dynamic_rotate %179 by %c240_i32_110 dim 1 : vector<32x256xf32>, i32 -> vector<32x256xf32>
    %221 = vector.broadcast %47 : vector<1x256xf32> to vector<32x256xf32>
    %222 = arith.mulf %220, %221 : vector<32x256xf32>
    %223 = vector.broadcast %31 : vector<32x1xf32> to vector<32x256xf32>
    %224 = arith.mulf %222, %223 : vector<32x256xf32>
    %225 = arith.addf %219, %224 : vector<32x256xf32>
    %c239_i32_111 = arith.constant 239 : i32
    %226 = tpu.dynamic_rotate %179 by %c239_i32_111 dim 1 : vector<32x256xf32>, i32 -> vector<32x256xf32>
    %227 = vector.broadcast %49 : vector<1x256xf32> to vector<32x256xf32>
    %228 = arith.mulf %226, %227 : vector<32x256xf32>
    %229 = vector.broadcast %33 : vector<32x1xf32> to vector<32x256xf32>
    %230 = arith.mulf %228, %229 : vector<32x256xf32>
    %231 = arith.addf %225, %230 : vector<32x256xf32>
    %232 = vector.broadcast %7 : vector<32x1xf32> to vector<32x256xf32>
    %233 = arith.mulf %231, %232 : vector<32x256xf32>
    %234 = vector.broadcast %9 : vector<32x1xf32> to vector<32x256xf32>
    %235 = arith.addf %233, %234 : vector<32x256xf32>
    %cst_112 = arith.constant dense<0.000000e+00> : vector<32xf32>
    %236 = vector.multi_reduction <add>, %235, %cst_112 [1] : vector<32x256xf32> to vector<32xf32>
    %237 = vector.shape_cast %236 : vector<32xf32> to vector<32x1xf32>
    %cst_113 = arith.constant 2.560000e+02 : f32
    %238 = vector.broadcast %cst_113 : f32 to vector<32x1xf32>
    %239 = arith.divf %237, %238 : vector<32x1xf32>
    %240 = arith.truncf %239 : vector<32x1xf32> to vector<32x1xbf16>
    %cst_114 = arith.constant dense<0.000000e+00> : vector<8x1xf32>
    %241 = tpu.matmul %50, %240, %cst_114 {dimension_numbers = #tpu.dot_dimension_numbers<[1], [0], [0], [1], [0, 0, 1, 1], [], []>} : vector<8x32xbf16>, vector<32x1xbf16>, vector<8x1xf32> -> vector<8x1xf32>
    %242 = arith.addf %241, %51 : vector<8x1xf32>
    %cst_115 = arith.constant 0.000000e+00 : f32
    %243 = vector.broadcast %cst_115 : f32 to vector<8x1xf32>
    %244 = arith.maximumf %242, %243 : vector<8x1xf32>
    %245 = arith.truncf %244 : vector<8x1xf32> to vector<8x1xbf16>
    %cst_116 = arith.constant dense<0.000000e+00> : vector<32x1xf32>
    %246 = tpu.matmul %52, %245, %cst_116 {dimension_numbers = #tpu.dot_dimension_numbers<[1], [0], [0], [1], [0, 0, 1, 1], [], []>} : vector<32x8xbf16>, vector<8x1xbf16>, vector<32x1xf32> -> vector<32x1xf32>
    %247 = arith.addf %246, %11 : vector<32x1xf32>
    %248 = arith.negf %247 : vector<32x1xf32>
    %249 = math.exp %248 : vector<32x1xf32>
    %cst_117 = arith.constant 1.000000e+00 : f32
    %250 = vector.broadcast %cst_117 : f32 to vector<32x1xf32>
    %251 = arith.addf %250, %249 : vector<32x1xf32>
    %252 = arith.divf %250, %251 : vector<32x1xf32>
    %253 = vector.broadcast %252 : vector<32x1xf32> to vector<32x256xf32>
    %254 = arith.mulf %235, %253 : vector<32x256xf32>
    %cst_118 = arith.constant 3.000000e+00 : f32
    %255 = vector.broadcast %cst_118 : f32 to vector<32x256xf32>
    %256 = arith.addf %254, %255 : vector<32x256xf32>
    %cst_119 = arith.constant 0.000000e+00 : f32
    %cst_120 = arith.constant 6.000000e+00 : f32
    %257 = vector.broadcast %cst_119 : f32 to vector<32x256xf32>
    %258 = arith.maximumf %257, %256 : vector<32x256xf32>
    %259 = vector.broadcast %cst_120 : f32 to vector<32x256xf32>
    %260 = arith.minimumf %259, %258 : vector<32x256xf32>
    %261 = arith.mulf %254, %260 : vector<32x256xf32>
    %cst_121 = arith.constant 0.166666672 : f32
    %262 = vector.broadcast %cst_121 : f32 to vector<32x256xf32>
    %263 = arith.mulf %261, %262 : vector<32x256xf32>
    %264 = arith.truncf %263 : vector<32x256xf32> to vector<32x256xbf16>
    %cst_122 = arith.constant dense<0.000000e+00> : vector<16x256xf32>
    %265 = tpu.matmul %1, %264, %cst_122 {dimension_numbers = #tpu.dot_dimension_numbers<[1], [0], [0], [1], [0, 0, 1, 1], [], []>} : vector<16x32xbf16>, vector<32x256xbf16>, vector<16x256xf32> -> vector<16x256xf32>
    %266 = vector.broadcast %13 : vector<16x1xf32> to vector<16x256xf32>
    %267 = arith.mulf %265, %266 : vector<16x256xf32>
    %268 = vector.broadcast %15 : vector<16x1xf32> to vector<16x256xf32>
    %269 = arith.addf %267, %268 : vector<16x256xf32>
    %270 = arith.extf %165 : vector<16x256xbf16> to vector<16x256xf32>
    %271 = arith.addf %269, %270 : vector<16x256xf32>
    %c1_123 = arith.constant 1 : index
    %c0_124 = arith.constant 0 : index
    %c0_125 = arith.constant 0 : index
    %272 = vector.load %arg11[%c1_123, %c0_124, %c0_125] : memref<2x16x256xf32, #tpu.memory_space<vmem>>, vector<1x16x256xf32>
    %273 = vector.shape_cast %272 : vector<1x16x256xf32> to vector<16x256xf32>
    %274 = vector.shape_cast %271 : vector<16x256xf32> to vector<1x16x256xf32>
    tpu.vector_store %arg11[%c1_123, %c0_124, %c0_125], %274 {strides = array<i32>} : memref<2x16x256xf32, #tpu.memory_space<vmem>>, vector<1x16x256xf32>,
    return
  }
  func.func @transform_0(%arg0: i32) -> (i32, i32, i32) {
    %c0_i32 = arith.constant 0 : i32
    %c0_i32_0 = arith.constant 0 : i32
    %c0_i32_1 = arith.constant 0 : i32
    return %arg0, %c0_i32, %c0_i32_0 : i32, i32, i32
  }
  func.func @transform_1(%arg0: i32) -> (i32, i32) {
    %c0_i32 = arith.constant 0 : i32
    %c0_i32_0 = arith.constant 0 : i32
    %c0_i32_1 = arith.constant 0 : i32
    return %c0_i32, %c0_i32_0 : i32, i32
  }
  func.func @transform_2(%arg0: i32) -> (i32, i32, i32) {
    %c0_i32 = arith.constant 0 : i32
    %c0_i32_0 = arith.constant 0 : i32
    %c0_i32_1 = arith.constant 0 : i32
    %c0_i32_2 = arith.constant 0 : i32
    return %c0_i32, %c0_i32_0, %c0_i32_1 : i32, i32, i32
  }
  func.func @transform_3(%arg0: i32) -> (i32, i32, i32) {
    %c0_i32 = arith.constant 0 : i32
    %c0_i32_0 = arith.constant 0 : i32
    %c0_i32_1 = arith.constant 0 : i32
    %c0_i32_2 = arith.constant 0 : i32
    return %c0_i32, %c0_i32_0, %c0_i32_1 : i32, i32, i32
  }
  func.func @transform_4(%arg0: i32) -> (i32, i32, i32) {
    %c0_i32 = arith.constant 0 : i32
    %c0_i32_0 = arith.constant 0 : i32
    %c0_i32_1 = arith.constant 0 : i32
    %c0_i32_2 = arith.constant 0 : i32
    return %c0_i32, %c0_i32_0, %c0_i32_1 : i32, i32, i32
  }
  func.func @transform_5(%arg0: i32) -> (i32, i32) {
    %c0_i32 = arith.constant 0 : i32
    %c0_i32_0 = arith.constant 0 : i32
    %c0_i32_1 = arith.constant 0 : i32
    return %c0_i32, %c0_i32_0 : i32, i32
  }
  func.func @transform_6(%arg0: i32) -> (i32, i32) {
    %c0_i32 = arith.constant 0 : i32
    %c0_i32_0 = arith.constant 0 : i32
    %c0_i32_1 = arith.constant 0 : i32
    return %c0_i32, %c0_i32_0 : i32, i32
  }
  func.func @transform_7(%arg0: i32) -> (i32, i32) {
    %c0_i32 = arith.constant 0 : i32
    %c0_i32_0 = arith.constant 0 : i32
    %c0_i32_1 = arith.constant 0 : i32
    return %c0_i32, %c0_i32_0 : i32, i32
  }
  func.func @transform_8(%arg0: i32) -> (i32, i32) {
    %c0_i32 = arith.constant 0 : i32
    %c0_i32_0 = arith.constant 0 : i32
    %c0_i32_1 = arith.constant 0 : i32
    return %c0_i32, %c0_i32_0 : i32, i32
  }
  func.func @transform_9(%arg0: i32) -> (i32, i32, i32) {
    %c0_i32 = arith.constant 0 : i32
    %c0_i32_0 = arith.constant 0 : i32
    %c0_i32_1 = arith.constant 0 : i32
    %c0_i32_2 = arith.constant 0 : i32
    return %c0_i32, %c0_i32_0, %c0_i32_1 : i32, i32, i32
  }
  func.func @transform_10(%arg0: i32) -> (i32, i32, i32) {
    %c0_i32 = arith.constant 0 : i32
    %c0_i32_0 = arith.constant 0 : i32
    %c0_i32_1 = arith.constant 0 : i32
    return %arg0, %c0_i32, %c0_i32_0 : i32, i32, i32
  }
}

</mosaic_0001>

<llo_original>
// kernel: tpu_custom_call.1
$region0: #{tpu_custom_call.1}
  #allocation0 [shape = 'u32[]', space=smem, size = 0x4, offset = 0x4, fixed_abs, tag = 'smem constant byte address 0x4 - core index']
  #allocation1 [shape = 'u32[144,128]{1,0:T(1,128)}', space=vmem, size = 0x12000, scoped, tag = 'internal scratch']
  %s0 = inlined_call_operand.vmem [shape: bf16[2,16,256], index: 0, kind: input, shape index: {}]
  %s1 = inlined_call_operand.vmem [shape: bf16[32,16], index: 1, kind: input, shape index: {}]
  %s2 = inlined_call_operand.vmem [shape: f32[9,32,1], index: 2, kind: input, shape index: {}]
  %s3 = inlined_call_operand.vmem [shape: f32[9,1,256], index: 3, kind: input, shape index: {}]
  %s4 = inlined_call_operand.vmem [shape: f32[5,32,1], index: 4, kind: input, shape index: {}]
  %s5 = inlined_call_operand.vmem [shape: bf16[8,32], index: 5, kind: input, shape index: {}]
  %s6 = inlined_call_operand.vmem [shape: f32[8,1], index: 6, kind: input, shape index: {}]
  %s7 = inlined_call_operand.vmem [shape: bf16[32,8], index: 7, kind: input, shape index: {}]
  %s8 = inlined_call_operand.vmem [shape: bf16[16,32], index: 8, kind: input, shape index: {}]
  %s9 = inlined_call_operand.vmem [shape: f32[2,16,1], index: 9, kind: input, shape index: {}]
  %s10 = inlined_call_operand.hbm [shape: f32[2,16,256], index: 10, kind: output, shape index: {}]
  %s11 = sld [smem:[#allocation0]]
  $region50: #{tpu_custom_call.1} parent=0
    _
  %s13 = ssub.s32 1, %s11
  %s14 = scalar_select 0, %s13, %s11
  $region1: #{tpu_custom_call.1} parent=0
    #allocation2 [shape = 'u8[32768]{0}', space=vmem, size = 0x8000, scoped, tag = 'output window, operand 0, single buffered']
    #allocation3 [shape = 's32[1]{0}', space=sflag, size = 0x4, scoped, tag = 'scoped memory for tpu_custom_call.1']
    %15 = vsyncpa [#allocation3], 0
    // Predicated region
    $region2: #{tpu_custom_call.1} parent=1 // pred_check
      _
    $region3: #{tpu_custom_call.1} parent=1 // pred_check_branch
      %17 = sbr.rel (0) target = $region5
    $region4: #{tpu_custom_call.1} parent=1 // pred_region
      _
    $region5: #{tpu_custom_call.1} parent=1 // pred_fallthru
      _
    // Predicated region
    $region6: #{tpu_custom_call.1} parent=1 // pred_check
      _
    $region7: #{tpu_custom_call.1} parent=1 // pred_check_branch
      %19 = sbr.rel (0) target = $region9
    $region8: #{tpu_custom_call.1} parent=1 // pred_region
      _
    $region9: #{tpu_custom_call.1} parent=1 // pred_fallthru
      _
    // Predicated region
    $region10: #{tpu_custom_call.1} parent=1 // pred_check
      _
    $region11: #{tpu_custom_call.1} parent=1 // pred_check_branch
      %21 = sbr.rel (0) target = $region13
    $region12: #{tpu_custom_call.1} parent=1 // pred_region
      _
    $region13: #{tpu_custom_call.1} parent=1 // pred_fallthru
      _
    // Predicated region
    $region14: #{tpu_custom_call.1} parent=1 // pred_check
      _
    $region15: #{tpu_custom_call.1} parent=1 // pred_check_branch
      %23 = sbr.rel (0) target = $region17
    $region16: #{tpu_custom_call.1} parent=1 // pred_region
      _
    $region17: #{tpu_custom_call.1} parent=1 // pred_fallthru
      _
    // Predicated region
    $region18: #{tpu_custom_call.1} parent=1 // pred_check
      _
    $region19: #{tpu_custom_call.1} parent=1 // pred_check_branch
      %25 = sbr.rel (0) target = $region21
    $region20: #{tpu_custom_call.1} parent=1 // pred_region
      _
    $region21: #{tpu_custom_call.1} parent=1 // pred_fallthru
      _
    // Predicated region
    $region22: #{tpu_custom_call.1} parent=1 // pred_check
      _
    $region23: #{tpu_custom_call.1} parent=1 // pred_check_branch
      %27 = sbr.rel (0) target = $region25
    $region24: #{tpu_custom_call.1} parent=1 // pred_region
      _
    $region25: #{tpu_custom_call.1} parent=1 // pred_fallthru
      _
    // Predicated region
    $region26: #{tpu_custom_call.1} parent=1 // pred_check
      _
    $region27: #{tpu_custom_call.1} parent=1 // pred_check_branch
      %29 = sbr.rel (0) target = $region29
    $region28: #{tpu_custom_call.1} parent=1 // pred_region
      _
    $region29: #{tpu_custom_call.1} parent=1 // pred_fallthru
      _
    // Predicated region
    $region30: #{tpu_custom_call.1} parent=1 // pred_check
      _
    $region31: #{tpu_custom_call.1} parent=1 // pred_check_branch
      %31 = sbr.rel (0) target = $region33
    $region32: #{tpu_custom_call.1} parent=1 // pred_region
      _
    $region33: #{tpu_custom_call.1} parent=1 // pred_fallthru
      _
    // Predicated region
    $region34: #{tpu_custom_call.1} parent=1 // pred_check
      _
    $region35: #{tpu_custom_call.1} parent=1 // pred_check_branch
      %33 = sbr.rel (0) target = $region37
    $region36: #{tpu_custom_call.1} parent=1 // pred_region
      _
    $region37: #{tpu_custom_call.1} parent=1 // pred_fallthru
      _
    // Predicated region
    $region38: #{tpu_custom_call.1} parent=1 // pred_check
      _
    $region39: #{tpu_custom_call.1} parent=1 // pred_check_branch
      %35 = sbr.rel (0) target = $region41
    $region40: #{tpu_custom_call.1} parent=1 // pred_region
      _
    $region41: #{tpu_custom_call.1} parent=1 // pred_fallthru
      _
    %v37 = vld [vmem:[%s1] sm:$0xf]
    %v38 = vld [vmem:[%s1 + $0x4] sm:$0xf]
    %v39 = vld [vmem:[%s1 + $0x8] sm:$0xf]
    %v40 = vld [vmem:[%s1 + $0xc] sm:$0xf]
    %v41 = vld [vmem:[%s8] sm:$0xf]
    %v42 = vld [vmem:[%s8 + $0x4] sm:$0xf]
    %v43 = vld [vmem:[%s4] sm:$0xff]
    %v44 = vld [vmem:[%s4 + $0x8] sm:$0xff]
    %v45 = vld [vmem:[%s4 + $0x10] sm:$0xff]
    %v46 = vld [vmem:[%s4 + $0x18] sm:$0xff]
    %s47 = scalar_lea.vmem %s4, 32
    %v48 = vld [vmem:[%s47] sm:$0xff]
    %v49 = vld [vmem:[%s47 + $0x8] sm:$0xff]
    %v50 = vld [vmem:[%s47 + $0x10] sm:$0xff]
    %v51 = vld [vmem:[%s47 + $0x18] sm:$0xff]
    %s52 = scalar_lea.vmem %s4, 64
    %v53 = vld [vmem:[%s52] sm:$0xff]
    %v54 = vld [vmem:[%s52 + $0x8] sm:$0xff]
    %v55 = vld [vmem:[%s52 + $0x10] sm:$0xff]
    %v56 = vld [vmem:[%s52 + $0x18] sm:$0xff]
    %s57 = scalar_lea.vmem %s4, 96
    %v58 = vld [vmem:[%s57] sm:$0xff]
    %v59 = vld [vmem:[%s57 + $0x8] sm:$0xff]
    %v60 = vld [vmem:[%s57 + $0x10] sm:$0xff]
    %v61 = vld [vmem:[%s57 + $0x18] sm:$0xff]
    %s62 = scalar_lea.vmem %s4, 128
    %v63 = vld [vmem:[%s62] sm:$0xff]
    %v64 = vld [vmem:[%s62 + $0x8] sm:$0xff]
    %v65 = vld [vmem:[%s62 + $0x10] sm:$0xff]
    %v66 = vld [vmem:[%s62 + $0x18] sm:$0xff]
    %v67 = vld [vmem:[%s9] sm:$0xff]
    %v68 = vld [vmem:[%s9 + $0x8] sm:$0xff]
    %s69 = scalar_lea.vmem %s9, 16
    %v70 = vld [vmem:[%s69] sm:$0xff]
    %v71 = vld [vmem:[%s69 + $0x8] sm:$0xff]
    %v72 = vld [vmem:[%s2] sm:$0xff]
    %v73 = vld [vmem:[%s2 + $0x8] sm:$0xff]
    %v74 = vld [vmem:[%s2 + $0x10] sm:$0xff]
    %v75 = vld [vmem:[%s2 + $0x18] sm:$0xff]
    %s76 = scalar_lea.vmem %s2, 32
    %v77 = vld [vmem:[%s76] sm:$0xff]
    %v78 = vld [vmem:[%s76 + $0x8] sm:$0xff]
    %v79 = vld [vmem:[%s76 + $0x10] sm:$0xff]
    %v80 = vld [vmem:[%s76 + $0x18] sm:$0xff]
    %s81 = scalar_lea.vmem %s2, 64
    %v82 = vld [vmem:[%s81] sm:$0xff]
    %v83 = vld [vmem:[%s81 + $0x8] sm:$0xff]
    %v84 = vld [vmem:[%s81 + $0x10] sm:$0xff]
    %v85 = vld [vmem:[%s81 + $0x18] sm:$0xff]
    %s86 = scalar_lea.vmem %s2, 96
    %v87 = vld [vmem:[%s86] sm:$0xff]
    %v88 = vld [vmem:[%s86 + $0x8] sm:$0xff]
    %v89 = vld [vmem:[%s86 + $0x10] sm:$0xff]
    %v90 = vld [vmem:[%s86 + $0x18] sm:$0xff]
    %s91 = scalar_lea.vmem %s2, 128
    %v92 = vld [vmem:[%s91] sm:$0xff]
    %v93 = vld [vmem:[%s91 + $0x8] sm:$0xff]
    %v94 = vld [vmem:[%s91 + $0x10] sm:$0xff]
    %v95 = vld [vmem:[%s91 + $0x18] sm:$0xff]
    %s96 = scalar_lea.vmem %s2, 160
    %v97 = vld [vmem:[%s96] sm:$0xff]
    %v98 = vld [vmem:[%s96 + $0x8] sm:$0xff]
    %v99 = vld [vmem:[%s96 + $0x10] sm:$0xff]
    %v100 = vld [vmem:[%s96 + $0x18] sm:$0xff]
    %s101 = scalar_lea.vmem %s2, 192
    %v102 = vld [vmem:[%s101] sm:$0xff]
    %v103 = vld [vmem:[%s101 + $0x8] sm:$0xff]
    %v104 = vld [vmem:[%s101 + $0x10] sm:$0xff]
    %v105 = vld [vmem:[%s101 + $0x18] sm:$0xff]
    %s106 = scalar_lea.vmem %s2, 224
    %v107 = vld [vmem:[%s106] sm:$0xff]
    %v108 = vld [vmem:[%s106 + $0x8] sm:$0xff]
    %v109 = vld [vmem:[%s106 + $0x10] sm:$0xff]
    %v110 = vld [vmem:[%s106 + $0x18] sm:$0xff]
    %s111 = scalar_lea.vmem %s2, 256
    %v112 = vld [vmem:[%s111] sm:$0xff]
    %v113 = vld [vmem:[%s111 + $0x8] sm:$0xff]
    %v114 = vld [vmem:[%s111 + $0x10] sm:$0xff]
    %v115 = vld [vmem:[%s111 + $0x18] sm:$0xff]
    %v116 = vld [vmem:[%s3] sm:$0x3]
    %s117 = scalar_lea.vmem %s3, 2
    %v118 = vld [vmem:[%s117] sm:$0x3]
    %s119 = scalar_lea.vmem %s3, 4
    %v120 = vld [vmem:[%s119] sm:$0x3]
    %s121 = scalar_lea.vmem %s3, 6
    %v122 = vld [vmem:[%s121] sm:$0x3]
    %s123 = scalar_lea.vmem %s3, 10
    %v124 = vld [vmem:[%s123] sm:$0x3]
    %s125 = scalar_lea.vmem %s3, 12
    %v126 = vld [vmem:[%s125] sm:$0x3]
    %s127 = scalar_lea.vmem %s3, 14
    %v128 = vld [vmem:[%s127] sm:$0x3]
    %s129 = scalar_lea.vmem %s3, 16
    %v130 = vld [vmem:[%s129] sm:$0x3]
    %v131 = vld [vmem:[%s5] sm:$0xf]
    %v132 = vld [vmem:[%s6] sm:$0xff]
    %v133 = vld [vmem:[%s7] sm:$0xf]
    %v134 = vld [vmem:[%s7 + $0x4] sm:$0xf]
    %v135 = vld [vmem:[%s7 + $0x8] sm:$0xf]
    %v136 = vld [vmem:[%s7 + $0xc] sm:$0xf]
    %v137 = vld [vmem:[%s0] sm:$0xff]
    %v138 = vld [vmem:[%s0 + $0x8] sm:$0xff]
    %v143 = vunpack.c.l.b16 %v37
    %v144 = vunpack.c.l.b16 %v38
    %v145 = vunpack.c.l.b16 %v39
    %v146 = vunpack.c.l.b16 %v40
    %v147 = vpack.c.b16 %v144, %v143
    %v148 = vpack.c.b16 %v146, %v145
    %v151 = vunpack.c.l.b16 %v137
    %v152 = vunpack.c.h.b16 %v137
    %v153 = vunpack.c.l.b16 %v138
    %v154 = vunpack.c.h.b16 %v138
    %v155 = vpack.c.b16 %v153, %v151
    %v156 = vpack.c.b16 %v154, %v152
    %vm159 = vcmask 130048
    %v161 = vsel %vm159, %v147, 0
    %v164 = vsel %vm159, %v148, 0
    %166 = vmatprep.subr.bf16.mxu0 0
    %167 = vmatpush1.bf16.msra.mxu0 0
    %168 = vmatprep.subr.bf16.mxu0 0
    %169 = vmatpush1.bf16.msra.mxu0 0
    %170 = vmatprep.subr.bf16.mxu0 0
    %171 = vmatpush1.bf16.msra.mxu0 0
    %172 = vmatprep.subr.bf16.mxu0 0
    %173 = vmatpush1.bf16.msra.mxu0 0
    %174 = vmatprep.subr.bf16.mxu0 0
    %175 = vmatpush1.bf16.msra.mxu0 0
    %176 = vmatprep.subr.bf16.mxu0 0
    %177 = vmatpush1.bf16.msra.mxu0 0
    %178 = vmatprep.subr.bf16.mxu0 0
    %179 = vmatpush1.bf16.msra.mxu0 0
    %180 = vmatprep.subr.bf16.mxu0 %v156
    %181 = vmatpush1.bf16.msra.mxu0 %v155
    %182 = vmatprep.subr.bf16.mxu0 0
    %183 = vmatpush2.bf16.msra.mxu0 0
    %184 = vmatprep.subr.bf16.mxu0 0
    %185 = vmatpush2.bf16.msra.mxu0 0
    %186 = vmatprep.subr.bf16.mxu0 0
    %187 = vmatpush2.bf16.msra.mxu0 0
    %188 = vmatprep.subr.bf16.mxu0 0
    %189 = vmatpush2.bf16.msra.mxu0 0
    %190 = vmatprep.subr.bf16.mxu0 0
    %191 = vmatpush2.bf16.msra.mxu0 0
    %192 = vmatprep.subr.bf16.mxu0 0
    %193 = vmatpush2.bf16.msra.mxu0 0
    %194 = vmatprep.subr.bf16.mxu0 0
    %195 = vmatpush2.bf16.msra.mxu0 0
    %196 = vmatprep.subr.bf16.mxu0 0
    %197 = vmatpush2.bf16.msra.mxu0 0
    %198 = vmatprep.mubr.bf16.mxu0 0
    %199 = vmatmul.mubr.bf16.gmra.mxu0 %v161
    %v200 = vpop.f32.mrf.mxu0
    %v201 = vadd.f32 0.0, %v200
    %v202 = vpop.f32.mrf.mxu0
    %v203 = vadd.f32 0.0, %v202
    %v204 = vpop.f32.mrf.mxu0
    %v205 = vadd.f32 0.0, %v204
    %v206 = vpop.f32.mrf.mxu0
    %v207 = vadd.f32 0.0, %v206
    %208 = vmatprep.mubr.bf16.mxu0 0
    %209 = vmatmul.mubr.bf16.gmra.mxu0 %v164
    %v210 = vpop.f32.mrf.mxu0
    %v211 = vadd.f32 0.0, %v210
    %v212 = vpop.f32.mrf.mxu0
    %v213 = vadd.f32 0.0, %v212
    %v214 = vpop.f32.mrf.mxu0
    %v215 = vadd.f32 0.0, %v214
    %v216 = vpop.f32.mrf.mxu0
    %v217 = vadd.f32 0.0, %v216
    %218 = vdwg.mxu0
    %220 = vset.pattern.permute.xlu0 0
    %221 = vperm.xlu0 %220, %v43
    %v222 = vpop.permute.xlu0 %221
    %225 = vset.pattern.permute.xlu0 0
    %226 = vperm.xlu0 %225, %v44
    %v227 = vpop.permute.xlu0 %226
    %230 = vset.pattern.permute.xlu0 0
    %231 = vperm.xlu0 %230, %v45
    %v232 = vpop.permute.xlu0 %231
    %235 = vset.pattern.permute.xlu0 0
    %236 = vperm.xlu0 %235, %v46
    %v237 = vpop.permute.xlu0 %236
    %v239 = vmul.f32 %v201, %v222
    %v240 = vmul.f32 %v203, %v222
    %v241 = vmul.f32 %v205, %v227
    %v242 = vmul.f32 %v207, %v227
    %v243 = vmul.f32 %v211, %v232
    %v244 = vmul.f32 %v213, %v232
    %v245 = vmul.f32 %v215, %v237
    %v246 = vmul.f32 %v217, %v237
    %248 = vset.pattern.permute.xlu0 0
    %249 = vperm.xlu0 %248, %v48
    %v250 = vpop.permute.xlu0 %249
    %253 = vset.pattern.permute.xlu0 0
    %254 = vperm.xlu0 %253, %v49
    %v255 = vpop.permute.xlu0 %254
    %258 = vset.pattern.permute.xlu0 0
    %259 = vperm.xlu0 %258, %v50
    %v260 = vpop.permute.xlu0 %259
    %263 = vset.pattern.permute.xlu0 0
    %264 = vperm.xlu0 %263, %v51
    %v265 = vpop.permute.xlu0 %264
    %v267 = vadd.f32 %v239, %v250
    %v268 = vadd.f32 %v240, %v250
    %v269 = vadd.f32 %v241, %v255
    %v270 = vadd.f32 %v242, %v255
    %v271 = vadd.f32 %v243, %v260
    %v272 = vadd.f32 %v244, %v260
    %v273 = vadd.f32 %v245, %v265
    %v274 = vadd.f32 %v246, %v265
    %v275 = vadd.f32 %v267, 3.0
    %v276 = vadd.f32 %v268, 3.0
    %v277 = vadd.f32 %v269, 3.0
    %v278 = vadd.f32 %v270, 3.0
    %v279 = vadd.f32 %v271, 3.0
    %v280 = vadd.f32 %v272, 3.0
    %v281 = vadd.f32 %v273, 3.0
    %v282 = vadd.f32 %v274, 3.0
    %v283 = vmax.f32 %v275, 0.0
    %v284 = vmax.f32 %v276, 0.0
    %v285 = vmax.f32 %v277, 0.0
    %v286 = vmax.f32 %v278, 0.0
    %v287 = vmax.f32 %v279, 0.0
    %v288 = vmax.f32 %v280, 0.0
    %v289 = vmax.f32 %v281, 0.0
    %v290 = vmax.f32 %v282, 0.0
    %v291 = vmin.f32 %v283, 6.0
    %v292 = vmin.f32 %v284, 6.0
    %v293 = vmin.f32 %v285, 6.0
    %v294 = vmin.f32 %v286, 6.0
    %v295 = vmin.f32 %v287, 6.0
    %v296 = vmin.f32 %v288, 6.0
    %v297 = vmin.f32 %v289, 6.0
    %v298 = vmin.f32 %v290, 6.0
    %v299 = vmul.f32 %v267, %v291
    %v300 = vmul.f32 %v268, %v292
    %v301 = vmul.f32 %v269, %v293
    %v302 = vmul.f32 %v270, %v294
    %v303 = vmul.f32 %v271, %v295
    %v304 = vmul.f32 %v272, %v296
    %v305 = vmul.f32 %v273, %v297
    %v306 = vmul.f32 %v274, %v298
    %v307 = vmul.f32 %v299, 0.16666667
    %v308 = vmul.f32 %v300, 0.16666667
    %v309 = vmul.f32 %v301, 0.16666667
    %v310 = vmul.f32 %v302, 0.16666667
    %v311 = vmul.f32 %v303, 0.16666667
    %v312 = vmul.f32 %v304, 0.16666667
    %v313 = vmul.f32 %v305, 0.16666667
    %v314 = vmul.f32 %v306, 0.16666667
    %315 = vrot.lane.b32.xlu0 %v307, 17
    %v316 = vpop.permute.xlu0 %315
    %317 = vrot.lane.b32.xlu0 %v309, 17
    %v318 = vpop.permute.xlu0 %317
    %319 = vrot.lane.b32.xlu0 %v311, 17
    %v320 = vpop.permute.xlu0 %319
    %321 = vrot.lane.b32.xlu0 %v313, 17
    %v322 = vpop.permute.xlu0 %321
    %323 = vrot.lane.b32.xlu0 %v308, 17
    %v324 = vpop.permute.xlu0 %323
    %325 = vrot.lane.b32.xlu0 %v310, 17
    %v326 = vpop.permute.xlu0 %325
    %327 = vrot.lane.b32.xlu0 %v312, 17
    %v328 = vpop.permute.xlu0 %327
    %329 = vrot.lane.b32.xlu0 %v314, 17
    %v330 = vpop.permute.xlu0 %329
    %v331 = vlaneseq
    %v332 = vand.u32 %v331, 127
    %vm333 = vcmp.lt.s32.totalorder %v332, 17
    %v334 = vsel %vm333, %v316, %v324
    %v335 = vsel %vm333, %v318, %v326
    %v336 = vsel %vm333, %v320, %v328
    %v337 = vsel %vm333, %v322, %v330
    %v338 = vsel %vm333, %v324, %v316
    %v339 = vsel %vm333, %v326, %v318
    %v340 = vsel %vm333, %v328, %v320
    %v341 = vsel %vm333, %v330, %v322
    %v343 = vlaneseq
    %v344 = vshrl.u32 %v343, 7
    %v345 = vsub.s32 0, %v344
    %v346 = vrot.slane %v116, %v345
    %v347 = vlaneseq
    %v348 = vshrl.u32 %v347, 7
    %v349 = vsub.s32 1, %v348
    %v350 = vrot.slane %v116, %v349
    %v353 = vmul.f32 %v338, %v346
    %v354 = vmul.f32 %v334, %v350
    %v355 = vmul.f32 %v339, %v346
    %v356 = vmul.f32 %v335, %v350
    %v357 = vmul.f32 %v340, %v346
    %v358 = vmul.f32 %v336, %v350
    %v359 = vmul.f32 %v341, %v346
    %v360 = vmul.f32 %v337, %v350
    %362 = vset.pattern.permute.xlu0 0
    %363 = vperm.xlu0 %362, %v72
    %v364 = vpop.permute.xlu0 %363
    %367 = vset.pattern.permute.xlu0 0
    %368 = vperm.xlu0 %367, %v73
    %v369 = vpop.permute.xlu0 %368
    %372 = vset.pattern.permute.xlu0 0
    %373 = vperm.xlu0 %372, %v74
    %v374 = vpop.permute.xlu0 %373
    %377 = vset.pattern.permute.xlu0 0
    %378 = vperm.xlu0 %377, %v75
    %v379 = vpop.permute.xlu0 %378
    %v381 = vmul.f32 %v353, %v364
    %v382 = vmul.f32 %v354, %v364
    %v383 = vmul.f32 %v355, %v369
    %v384 = vmul.f32 %v356, %v369
    %v385 = vmul.f32 %v357, %v374
    %v386 = vmul.f32 %v358, %v374
    %v387 = vmul.f32 %v359, %v379
    %v388 = vmul.f32 %v360, %v379
    %v389 = vadd.f32 %v381, 0.0
    %v390 = vadd.f32 %v382, 0.0
    %v391 = vadd.f32 %v383, 0.0
    %v392 = vadd.f32 %v384, 0.0
    %v393 = vadd.f32 %v385, 0.0
    %v394 = vadd.f32 %v386, 0.0
    %v395 = vadd.f32 %v387, 0.0
    %v396 = vadd.f32 %v388, 0.0
    %397 = vrot.lane.b32.xlu0 %v307, 16
    %v398 = vpop.permute.xlu0 %397
    %399 = vrot.lane.b32.xlu0 %v309, 16
    %v400 = vpop.permute.xlu0 %399
    %401 = vrot.lane.b32.xlu0 %v311, 16
    %v402 = vpop.permute.xlu0 %401
    %403 = vrot.lane.b32.xlu0 %v313, 16
    %v404 = vpop.permute.xlu0 %403
    %405 = vrot.lane.b32.xlu0 %v308, 16
    %v406 = vpop.permute.xlu0 %405
    %407 = vrot.lane.b32.xlu0 %v310, 16
    %v408 = vpop.permute.xlu0 %407
    %409 = vrot.lane.b32.xlu0 %v312, 16
    %v410 = vpop.permute.xlu0 %409
    %411 = vrot.lane.b32.xlu0 %v314, 16
    %v412 = vpop.permute.xlu0 %411
    %vm413 = vcmp.lt.s32.totalorder %v332, 16
    %v414 = vsel %vm413, %v398, %v406
    %v415 = vsel %vm413, %v400, %v408
    %v416 = vsel %vm413, %v402, %v410
    %v417 = vsel %vm413, %v404, %v412
    %v418 = vsel %vm413, %v406, %v398
    %v419 = vsel %vm413, %v408, %v400
    %v420 = vsel %vm413, %v410, %v402
    %v421 = vsel %vm413, %v412, %v404
    %v423 = vlaneseq
    %v424 = vshrl.u32 %v423, 7
    %v425 = vsub.s32 0, %v424
    %v426 = vrot.slane %v118, %v425
    %v427 = vlaneseq
    %v428 = vshrl.u32 %v427, 7
    %v429 = vsub.s32 1, %v428
    %v430 = vrot.slane %v118, %v429
    %v433 = vmul.f32 %v418, %v426
    %v434 = vmul.f32 %v414, %v430
    %v435 = vmul.f32 %v419, %v426
    %v436 = vmul.f32 %v415, %v430
    %v437 = vmul.f32 %v420, %v426
    %v438 = vmul.f32 %v416, %v430
    %v439 = vmul.f32 %v421, %v426
    %v440 = vmul.f32 %v417, %v430
    %442 = vset.pattern.permute.xlu0 0
    %443 = vperm.xlu0 %442, %v77
    %v444 = vpop.permute.xlu0 %443
    %447 = vset.pattern.permute.xlu0 0
    %448 = vperm.xlu0 %447, %v78
    %v449 = vpop.permute.xlu0 %448
    %452 = vset.pattern.permute.xlu0 0
    %453 = vperm.xlu0 %452, %v79
    %v454 = vpop.permute.xlu0 %453
    %457 = vset.pattern.permute.xlu0 0
    %458 = vperm.xlu0 %457, %v80
    %v459 = vpop.permute.xlu0 %458
    %v461 = vmul.f32 %v433, %v444
    %v462 = vmul.f32 %v434, %v444
    %v463 = vmul.f32 %v435, %v449
    %v464 = vmul.f32 %v436, %v449
    %v465 = vmul.f32 %v437, %v454
    %v466 = vmul.f32 %v438, %v454
    %v467 = vmul.f32 %v439, %v459
    %v468 = vmul.f32 %v440, %v459
    %v469 = vadd.f32 %v389, %v461
    %v470 = vadd.f32 %v390, %v462
    %v471 = vadd.f32 %v391, %v463
    %v472 = vadd.f32 %v392, %v464
    %v473 = vadd.f32 %v393, %v465
    %v474 = vadd.f32 %v394, %v466
    %v475 = vadd.f32 %v395, %v467
    %v476 = vadd.f32 %v396, %v468
    %477 = vrot.lane.b32.xlu0 %v307, 15
    %v478 = vpop.permute.xlu0 %477
    %479 = vrot.lane.b32.xlu0 %v309, 15
    %v480 = vpop.permute.xlu0 %479
    %481 = vrot.lane.b32.xlu0 %v311, 15
    %v482 = vpop.permute.xlu0 %481
    %483 = vrot.lane.b32.xlu0 %v313, 15
    %v484 = vpop.permute.xlu0 %483
    %485 = vrot.lane.b32.xlu0 %v308, 15
    %v486 = vpop.permute.xlu0 %485
    %487 = vrot.lane.b32.xlu0 %v310, 15
    %v488 = vpop.permute.xlu0 %487
    %489 = vrot.lane.b32.xlu0 %v312, 15
    %v490 = vpop.permute.xlu0 %489
    %491 = vrot.lane.b32.xlu0 %v314, 15
    %v492 = vpop.permute.xlu0 %491
    %vm493 = vcmp.lt.s32.totalorder %v332, 15
    %v494 = vsel %vm493, %v478, %v486
    %v495 = vsel %vm493, %v480, %v488
    %v496 = vsel %vm493, %v482, %v490
    %v497 = vsel %vm493, %v484, %v492
    %v498 = vsel %vm493, %v486, %v478
    %v499 = vsel %vm493, %v488, %v480
    %v500 = vsel %vm493, %v490, %v482
    %v501 = vsel %vm493, %v492, %v484
    %v503 = vlaneseq
    %v504 = vshrl.u32 %v503, 7
    %v505 = vsub.s32 0, %v504
    %v506 = vrot.slane %v120, %v505
    %v507 = vlaneseq
    %v508 = vshrl.u32 %v507, 7
    %v509 = vsub.s32 1, %v508
    %v510 = vrot.slane %v120, %v509
    %v513 = vmul.f32 %v498, %v506
    %v514 = vmul.f32 %v494, %v510
    %v515 = vmul.f32 %v499, %v506
    %v516 = vmul.f32 %v495, %v510
    %v517 = vmul.f32 %v500, %v506
    %v518 = vmul.f32 %v496, %v510
    %v519 = vmul.f32 %v501, %v506
    %v520 = vmul.f32 %v497, %v510
    %522 = vset.pattern.permute.xlu0 0
    %523 = vperm.xlu0 %522, %v82
    %v524 = vpop.permute.xlu0 %523
    %527 = vset.pattern.permute.xlu0 0
    %528 = vperm.xlu0 %527, %v83
    %v529 = vpop.permute.xlu0 %528
    %532 = vset.pattern.permute.xlu0 0
    %533 = vperm.xlu0 %532, %v84
    %v534 = vpop.permute.xlu0 %533
    %537 = vset.pattern.permute.xlu0 0
    %538 = vperm.xlu0 %537, %v85
    %v539 = vpop.permute.xlu0 %538
    %v541 = vmul.f32 %v513, %v524
    %v542 = vmul.f32 %v514, %v524
    %v543 = vmul.f32 %v515, %v529
    %v544 = vmul.f32 %v516, %v529
    %v545 = vmul.f32 %v517, %v534
    %v546 = vmul.f32 %v518, %v534
    %v547 = vmul.f32 %v519, %v539
    %v548 = vmul.f32 %v520, %v539
    %v549 = vadd.f32 %v469, %v541
    %v550 = vadd.f32 %v470, %v542
    %v551 = vadd.f32 %v471, %v543
    %v552 = vadd.f32 %v472, %v544
    %v553 = vadd.f32 %v473, %v545
    %v554 = vadd.f32 %v474, %v546
    %v555 = vadd.f32 %v475, %v547
    %v556 = vadd.f32 %v476, %v548
    %557 = vrot.lane.b32.xlu0 %v307, 1
    %v558 = vpop.permute.xlu0 %557
    %559 = vrot.lane.b32.xlu0 %v309, 1
    %v560 = vpop.permute.xlu0 %559
    %561 = vrot.lane.b32.xlu0 %v311, 1
    %v562 = vpop.permute.xlu0 %561
    %563 = vrot.lane.b32.xlu0 %v313, 1
    %v564 = vpop.permute.xlu0 %563
    %565 = vrot.lane.b32.xlu0 %v308, 1
    %v566 = vpop.permute.xlu0 %565
    %567 = vrot.lane.b32.xlu0 %v310, 1
    %v568 = vpop.permute.xlu0 %567
    %569 = vrot.lane.b32.xlu0 %v312, 1
    %v570 = vpop.permute.xlu0 %569
    %571 = vrot.lane.b32.xlu0 %v314, 1
    %v572 = vpop.permute.xlu0 %571
    %vm573 = vcmp.lt.s32.totalorder %v332, 1
    %v574 = vsel %vm573, %v558, %v566
    %v575 = vsel %vm573, %v560, %v568
    %v576 = vsel %vm573, %v562, %v570
    %v577 = vsel %vm573, %v564, %v572
    %v578 = vsel %vm573, %v566, %v558
    %v579 = vsel %vm573, %v568, %v560
    %v580 = vsel %vm573, %v570, %v562
    %v581 = vsel %vm573, %v572, %v564
    %v583 = vlaneseq
    %v584 = vshrl.u32 %v583, 7
    %v585 = vsub.s32 0, %v584
    %v586 = vrot.slane %v122, %v585
    %v587 = vlaneseq
    %v588 = vshrl.u32 %v587, 7
    %v589 = vsub.s32 1, %v588
    %v590 = vrot.slane %v122, %v589
    %v593 = vmul.f32 %v578, %v586
    %v594 = vmul.f32 %v574, %v590
    %v595 = vmul.f32 %v579, %v586
    %v596 = vmul.f32 %v575, %v590
    %v597 = vmul.f32 %v580, %v586
    %v598 = vmul.f32 %v576, %v590
    %v599 = vmul.f32 %v581, %v586
    %v600 = vmul.f32 %v577, %v590
    %602 = vset.pattern.permute.xlu0 0
    %603 = vperm.xlu0 %602, %v87
    %v604 = vpop.permute.xlu0 %603
    %607 = vset.pattern.permute.xlu0 0
    %608 = vperm.xlu0 %607, %v88
    %v609 = vpop.permute.xlu0 %608
    %612 = vset.pattern.permute.xlu0 0
    %613 = vperm.xlu0 %612, %v89
    %v614 = vpop.permute.xlu0 %613
    %617 = vset.pattern.permute.xlu0 0
    %618 = vperm.xlu0 %617, %v90
    %v619 = vpop.permute.xlu0 %618
    %v621 = vmul.f32 %v593, %v604
    %v622 = vmul.f32 %v594, %v604
    %v623 = vmul.f32 %v595, %v609
    %v624 = vmul.f32 %v596, %v609
    %v625 = vmul.f32 %v597, %v614
    %v626 = vmul.f32 %v598, %v614
    %v627 = vmul.f32 %v599, %v619
    %v628 = vmul.f32 %v600, %v619
    %v629 = vadd.f32 %v549, %v621
    %v630 = vadd.f32 %v550, %v622
    %v631 = vadd.f32 %v551, %v623
    %v632 = vadd.f32 %v552, %v624
    %v633 = vadd.f32 %v553, %v625
    %v634 = vadd.f32 %v554, %v626
    %v635 = vadd.f32 %v555, %v627
    %v636 = vadd.f32 %v556, %v628
    %638 = vset.pattern.permute.xlu0 0
    %639 = vperm.xlu0 %638, %v92
    %v640 = vpop.permute.xlu0 %639
    %643 = vset.pattern.permute.xlu0 0
    %644 = vperm.xlu0 %643, %v93
    %v645 = vpop.permute.xlu0 %644
    %648 = vset.pattern.permute.xlu0 0
    %649 = vperm.xlu0 %648, %v94
    %v650 = vpop.permute.xlu0 %649
    %653 = vset.pattern.permute.xlu0 0
    %654 = vperm.xlu0 %653, %v95
    %v655 = vpop.permute.xlu0 %654
    %v657 = vmul.f32 %v307, %v640
    %v658 = vmul.f32 %v308, %v640
    %v659 = vmul.f32 %v309, %v645
    %v660 = vmul.f32 %v310, %v645
    %v661 = vmul.f32 %v311, %v650
    %v662 = vmul.f32 %v312, %v650
    %v663 = vmul.f32 %v313, %v655
    %v664 = vmul.f32 %v314, %v655
    %v665 = vadd.f32 %v629, %v657
    %v666 = vadd.f32 %v630, %v658
    %v667 = vadd.f32 %v631, %v659
    %v668 = vadd.f32 %v632, %v660
    %v669 = vadd.f32 %v633, %v661
    %v670 = vadd.f32 %v634, %v662
    %v671 = vadd.f32 %v635, %v663
    %v672 = vadd.f32 %v636, %v664
    %673 = vrot.lane.b32.xlu0 %v307, 127
    %v674 = vpop.permute.xlu0 %673
    %675 = vrot.lane.b32.xlu0 %v309, 127
    %v676 = vpop.permute.xlu0 %675
    %677 = vrot.lane.b32.xlu0 %v311, 127
    %v678 = vpop.permute.xlu0 %677
    %679 = vrot.lane.b32.xlu0 %v313, 127
    %v680 = vpop.permute.xlu0 %679
    %681 = vrot.lane.b32.xlu0 %v308, 127
    %v682 = vpop.permute.xlu0 %681
    %683 = vrot.lane.b32.xlu0 %v310, 127
    %v684 = vpop.permute.xlu0 %683
    %685 = vrot.lane.b32.xlu0 %v312, 127
    %v686 = vpop.permute.xlu0 %685
    %687 = vrot.lane.b32.xlu0 %v314, 127
    %v688 = vpop.permute.xlu0 %687
    %vm689 = vcmp.lt.s32.totalorder %v332, 127
    %v690 = vsel %vm689, %v674, %v682
    %v691 = vsel %vm689, %v676, %v684
    %v692 = vsel %vm689, %v678, %v686
    %v693 = vsel %vm689, %v680, %v688
    %v694 = vsel %vm689, %v682, %v674
    %v695 = vsel %vm689, %v684, %v676
    %v696 = vsel %vm689, %v686, %v678
    %v697 = vsel %vm689, %v688, %v680
    %v699 = vlaneseq
    %v700 = vshrl.u32 %v699, 7
    %v701 = vsub.s32 0, %v700
    %v702 = vrot.slane %v124, %v701
    %v703 = vlaneseq
    %v704 = vshrl.u32 %v703, 7
    %v705 = vsub.s32 1, %v704
    %v706 = vrot.slane %v124, %v705
    %v709 = vmul.f32 %v690, %v702
    %v710 = vmul.f32 %v694, %v706
    %v711 = vmul.f32 %v691, %v702
    %v712 = vmul.f32 %v695, %v706
    %v713 = vmul.f32 %v692, %v702
    %v714 = vmul.f32 %v696, %v706
    %v715 = vmul.f32 %v693, %v702
    %v716 = vmul.f32 %v697, %v706
    %718 = vset.pattern.permute.xlu0 0
    %719 = vperm.xlu0 %718, %v97
    %v720 = vpop.permute.xlu0 %719
    %723 = vset.pattern.permute.xlu0 0
    %724 = vperm.xlu0 %723, %v98
    %v725 = vpop.permute.xlu0 %724
    %728 = vset.pattern.permute.xlu0 0
    %729 = vperm.xlu0 %728, %v99
    %v730 = vpop.permute.xlu0 %729
    %733 = vset.pattern.permute.xlu0 0
    %734 = vperm.xlu0 %733, %v100
    %v735 = vpop.permute.xlu0 %734
    %v737 = vmul.f32 %v709, %v720
    %v738 = vmul.f32 %v710, %v720
    %v739 = vmul.f32 %v711, %v725
    %v740 = vmul.f32 %v712, %v725
    %v741 = vmul.f32 %v713, %v730
    %v742 = vmul.f32 %v714, %v730
    %v743 = vmul.f32 %v715, %v735
    %v744 = vmul.f32 %v716, %v735
    %v745 = vadd.f32 %v665, %v737
    %v746 = vadd.f32 %v666, %v738
    %v747 = vadd.f32 %v667, %v739
    %v748 = vadd.f32 %v668, %v740
    %v749 = vadd.f32 %v669, %v741
    %v750 = vadd.f32 %v670, %v742
    %v751 = vadd.f32 %v671, %v743
    %v752 = vadd.f32 %v672, %v744
    %753 = vrot.lane.b32.xlu0 %v307, 113
    %v754 = vpop.permute.xlu0 %753
    %755 = vrot.lane.b32.xlu0 %v309, 113
    %v756 = vpop.permute.xlu0 %755
    %757 = vrot.lane.b32.xlu0 %v311, 113
    %v758 = vpop.permute.xlu0 %757
    %759 = vrot.lane.b32.xlu0 %v313, 113
    %v760 = vpop.permute.xlu0 %759
    %761 = vrot.lane.b32.xlu0 %v308, 113
    %v762 = vpop.permute.xlu0 %761
    %763 = vrot.lane.b32.xlu0 %v310, 113
    %v764 = vpop.permute.xlu0 %763
    %765 = vrot.lane.b32.xlu0 %v312, 113
    %v766 = vpop.permute.xlu0 %765
    %767 = vrot.lane.b32.xlu0 %v314, 113
    %v768 = vpop.permute.xlu0 %767
    %vm769 = vcmp.lt.s32.totalorder %v332, 113
    %v770 = vsel %vm769, %v754, %v762
    %v771 = vsel %vm769, %v756, %v764
    %v772 = vsel %vm769, %v758, %v766
    %v773 = vsel %vm769, %v760, %v768
    %v774 = vsel %vm769, %v762, %v754
    %v775 = vsel %vm769, %v764, %v756
    %v776 = vsel %vm769, %v766, %v758
    %v777 = vsel %vm769, %v768, %v760
    %v779 = vlaneseq
    %v780 = vshrl.u32 %v779, 7
    %v781 = vsub.s32 0, %v780
    %v782 = vrot.slane %v126, %v781
    %v783 = vlaneseq
    %v784 = vshrl.u32 %v783, 7
    %v785 = vsub.s32 1, %v784
    %v786 = vrot.slane %v126, %v785
    %v789 = vmul.f32 %v770, %v782
    %v790 = vmul.f32 %v774, %v786
    %v791 = vmul.f32 %v771, %v782
    %v792 = vmul.f32 %v775, %v786
    %v793 = vmul.f32 %v772, %v782
    %v794 = vmul.f32 %v776, %v786
    %v795 = vmul.f32 %v773, %v782
    %v796 = vmul.f32 %v777, %v786
    %798 = vset.pattern.permute.xlu0 0
    %799 = vperm.xlu0 %798, %v102
    %v800 = vpop.permute.xlu0 %799
    %803 = vset.pattern.permute.xlu0 0
    %804 = vperm.xlu0 %803, %v103
    %v805 = vpop.permute.xlu0 %804
    %808 = vset.pattern.permute.xlu0 0
    %809 = vperm.xlu0 %808, %v104
    %v810 = vpop.permute.xlu0 %809
    %813 = vset.pattern.permute.xlu0 0
    %814 = vperm.xlu0 %813, %v105
    %v815 = vpop.permute.xlu0 %814
    %v817 = vmul.f32 %v789, %v800
    %v818 = vmul.f32 %v790, %v800
    %v819 = vmul.f32 %v791, %v805
    %v820 = vmul.f32 %v792, %v805
    %v821 = vmul.f32 %v793, %v810
    %v822 = vmul.f32 %v794, %v810
    %v823 = vmul.f32 %v795, %v815
    %v824 = vmul.f32 %v796, %v815
    %v825 = vadd.f32 %v745, %v817
    %v826 = vadd.f32 %v746, %v818
    %v827 = vadd.f32 %v747, %v819
    %v828 = vadd.f32 %v748, %v820
    %v829 = vadd.f32 %v749, %v821
    %v830 = vadd.f32 %v750, %v822
    %v831 = vadd.f32 %v751, %v823
    %v832 = vadd.f32 %v752, %v824
    %833 = vrot.lane.b32.xlu0 %v307, 112
    %v834 = vpop.permute.xlu0 %833
    %835 = vrot.lane.b32.xlu0 %v309, 112
    %v836 = vpop.permute.xlu0 %835
    %837 = vrot.lane.b32.xlu0 %v311, 112
    %v838 = vpop.permute.xlu0 %837
    %839 = vrot.lane.b32.xlu0 %v313, 112
    %v840 = vpop.permute.xlu0 %839
    %841 = vrot.lane.b32.xlu0 %v308, 112
    %v842 = vpop.permute.xlu0 %841
    %843 = vrot.lane.b32.xlu0 %v310, 112
    %v844 = vpop.permute.xlu0 %843
    %845 = vrot.lane.b32.xlu0 %v312, 112
    %v846 = vpop.permute.xlu0 %845
    %847 = vrot.lane.b32.xlu0 %v314, 112
    %v848 = vpop.permute.xlu0 %847
    %vm849 = vcmp.lt.s32.totalorder %v332, 112
    %v850 = vsel %vm849, %v834, %v842
    %v851 = vsel %vm849, %v836, %v844
    %v852 = vsel %vm849, %v838, %v846
    %v853 = vsel %vm849, %v840, %v848
    %v854 = vsel %vm849, %v842, %v834
    %v855 = vsel %vm849, %v844, %v836
    %v856 = vsel %vm849, %v846, %v838
    %v857 = vsel %vm849, %v848, %v840
    %v859 = vlaneseq
    %v860 = vshrl.u32 %v859, 7
    %v861 = vsub.s32 0, %v860
    %v862 = vrot.slane %v128, %v861
    %v863 = vlaneseq
    %v864 = vshrl.u32 %v863, 7
    %v865 = vsub.s32 1, %v864
    %v866 = vrot.slane %v128, %v865
    %v869 = vmul.f32 %v850, %v862
    %v870 = vmul.f32 %v854, %v866
    %v871 = vmul.f32 %v851, %v862
    %v872 = vmul.f32 %v855, %v866
    %v873 = vmul.f32 %v852, %v862
    %v874 = vmul.f32 %v856, %v866
    %v875 = vmul.f32 %v853, %v862
    %v876 = vmul.f32 %v857, %v866
    %878 = vset.pattern.permute.xlu0 0
    %879 = vperm.xlu0 %878, %v107
    %v880 = vpop.permute.xlu0 %879
    %883 = vset.pattern.permute.xlu0 0
    %884 = vperm.xlu0 %883, %v108
    %v885 = vpop.permute.xlu0 %884
    %888 = vset.pattern.permute.xlu0 0
    %889 = vperm.xlu0 %888, %v109
    %v890 = vpop.permute.xlu0 %889
    %893 = vset.pattern.permute.xlu0 0
    %894 = vperm.xlu0 %893, %v110
    %v895 = vpop.permute.xlu0 %894
    %v897 = vmul.f32 %v869, %v880
    %v898 = vmul.f32 %v870, %v880
    %v899 = vmul.f32 %v871, %v885
    %v900 = vmul.f32 %v872, %v885
    %v901 = vmul.f32 %v873, %v890
    %v902 = vmul.f32 %v874, %v890
    %v903 = vmul.f32 %v875, %v895
    %v904 = vmul.f32 %v876, %v895
    %v905 = vadd.f32 %v825, %v897
    %v906 = vadd.f32 %v826, %v898
    %v907 = vadd.f32 %v827, %v899
    %v908 = vadd.f32 %v828, %v900
    %v909 = vadd.f32 %v829, %v901
    %v910 = vadd.f32 %v830, %v902
    %v911 = vadd.f32 %v831, %v903
    %v912 = vadd.f32 %v832, %v904
    %913 = vrot.lane.b32.xlu0 %v307, 111
    %v914 = vpop.permute.xlu0 %913
    %915 = vrot.lane.b32.xlu0 %v309, 111
    %v916 = vpop.permute.xlu0 %915
    %917 = vrot.lane.b32.xlu0 %v311, 111
    %v918 = vpop.permute.xlu0 %917
    %919 = vrot.lane.b32.xlu0 %v313, 111
    %v920 = vpop.permute.xlu0 %919
    %921 = vrot.lane.b32.xlu0 %v308, 111
    %v922 = vpop.permute.xlu0 %921
    %923 = vrot.lane.b32.xlu0 %v310, 111
    %v924 = vpop.permute.xlu0 %923
    %925 = vrot.lane.b32.xlu0 %v312, 111
    %v926 = vpop.permute.xlu0 %925
    %927 = vrot.lane.b32.xlu0 %v314, 111
    %v928 = vpop.permute.xlu0 %927
    %vm929 = vcmp.lt.s32.totalorder %v332, 111
    %v930 = vsel %vm929, %v914, %v922
    %v931 = vsel %vm929, %v916, %v924
    %v932 = vsel %vm929, %v918, %v926
    %v933 = vsel %vm929, %v920, %v928
    %v934 = vsel %vm929, %v922, %v914
    %v935 = vsel %vm929, %v924, %v916
    %v936 = vsel %vm929, %v926, %v918
    %v937 = vsel %vm929, %v928, %v920
    %v939 = vlaneseq
    %v940 = vshrl.u32 %v939, 7
    %v941 = vsub.s32 0, %v940
    %v942 = vrot.slane %v130, %v941
    %v943 = vlaneseq
    %v944 = vshrl.u32 %v943, 7
    %v945 = vsub.s32 1, %v944
    %v946 = vrot.slane %v130, %v945
    %v949 = vmul.f32 %v930, %v942
    %v950 = vmul.f32 %v934, %v946
    %v951 = vmul.f32 %v931, %v942
    %v952 = vmul.f32 %v935, %v946
    %v953 = vmul.f32 %v932, %v942
    %v954 = vmul.f32 %v936, %v946
    %v955 = vmul.f32 %v933, %v942
    %v956 = vmul.f32 %v937, %v946
    %958 = vset.pattern.permute.xlu0 0
    %959 = vperm.xlu0 %958, %v112
    %v960 = vpop.permute.xlu0 %959
    %963 = vset.pattern.permute.xlu0 0
    %964 = vperm.xlu0 %963, %v113
    %v965 = vpop.permute.xlu0 %964
    %968 = vset.pattern.permute.xlu0 0
    %969 = vperm.xlu0 %968, %v114
    %v970 = vpop.permute.xlu0 %969
    %973 = vset.pattern.permute.xlu0 0
    %974 = vperm.xlu0 %973, %v115
    %v975 = vpop.permute.xlu0 %974
    %v977 = vmul.f32 %v949, %v960
    %v978 = vmul.f32 %v950, %v960
    %v979 = vmul.f32 %v951, %v965
    %v980 = vmul.f32 %v952, %v965
    %v981 = vmul.f32 %v953, %v970
    %v982 = vmul.f32 %v954, %v970
    %v983 = vmul.f32 %v955, %v975
    %v984 = vmul.f32 %v956, %v975
    %v985 = vadd.f32 %v905, %v977
    %v986 = vadd.f32 %v906, %v978
    %v987 = vadd.f32 %v907, %v979
    %v988 = vadd.f32 %v908, %v980
    %v989 = vadd.f32 %v909, %v981
    %v990 = vadd.f32 %v910, %v982
    %v991 = vadd.f32 %v911, %v983
    %v992 = vadd.f32 %v912, %v984
    %994 = vset.pattern.permute.xlu0 0
    %995 = vperm.xlu0 %994, %v53
    %v996 = vpop.permute.xlu0 %995
    %999 = vset.pattern.permute.xlu0 0
    %1000 = vperm.xlu0 %999, %v54
    %v1001 = vpop.permute.xlu0 %1000
    %1004 = vset.pattern.permute.xlu0 0
    %1005 = vperm.xlu0 %1004, %v55
    %v1006 = vpop.permute.xlu0 %1005
    %1009 = vset.pattern.permute.xlu0 0
    %1010 = vperm.xlu0 %1009, %v56
    %v1011 = vpop.permute.xlu0 %1010
    %v1013 = vmul.f32 %v985, %v996
    %v1014 = vmul.f32 %v986, %v996
    %v1015 = vmul.f32 %v987, %v1001
    %v1016 = vmul.f32 %v988, %v1001
    %v1017 = vmul.f32 %v989, %v1006
    %v1018 = vmul.f32 %v990, %v1006
    %v1019 = vmul.f32 %v991, %v1011
    %v1020 = vmul.f32 %v992, %v1011
    %1022 = vset.pattern.permute.xlu0 0
    %1023 = vperm.xlu0 %1022, %v58
    %v1024 = vpop.permute.xlu0 %1023
    %1027 = vset.pattern.permute.xlu0 0
    %1028 = vperm.xlu0 %1027, %v59
    %v1029 = vpop.permute.xlu0 %1028
    %1032 = vset.pattern.permute.xlu0 0
    %1033 = vperm.xlu0 %1032, %v60
    %v1034 = vpop.permute.xlu0 %1033
    %1037 = vset.pattern.permute.xlu0 0
    %1038 = vperm.xlu0 %1037, %v61
    %v1039 = vpop.permute.xlu0 %1038
    %v1041 = vadd.f32 %v1013, %v1024
    %v1042 = vadd.f32 %v1014, %v1024
    %v1043 = vadd.f32 %v1015, %v1029
    %v1044 = vadd.f32 %v1016, %v1029
    %v1045 = vadd.f32 %v1017, %v1034
    %v1046 = vadd.f32 %v1018, %v1034
    %v1047 = vadd.f32 %v1019, %v1039
    %v1048 = vadd.f32 %v1020, %v1039
    %v1049 = vadd.f32 %v1041, %v1042
    %1050 = vadd.xlane.f32.xlu0 %v1049
    %v1051 = vpop.xlane.xlu0 %1050
    %v1052 = vadd.f32 %v1043, %v1044
    %1053 = vadd.xlane.f32.xlu0 %v1052
    %v1054 = vpop.xlane.xlu0 %1053
    %v1055 = vadd.f32 %v1045, %v1046
    %1056 = vadd.xlane.f32.xlu0 %v1055
    %v1057 = vpop.xlane.xlu0 %1056
    %v1058 = vadd.f32 %v1047, %v1048
    %1059 = vadd.xlane.f32.xlu0 %v1058
    %v1060 = vpop.xlane.xlu0 %1059
    %v1061 = vrcp.pop 256.0
    %v1062 = vmul.f32 %v1051, %v1061
    %v1063 = vmul.f32 %v1054, %v1061
    %v1064 = vmul.f32 %v1057, %v1061
    %v1065 = vmul.f32 %v1060, %v1061
    %v1066 = vpack.c.bf16 %v1063, %v1062
    %v1067 = vpack.c.bf16 %v1065, %v1064
    %vm1068 = vcmask 261120
    %v1070 = vsel %vm1068, %v131, 0
    %1072 = vmatprep.subr.bf16.mxu0 0
    %1073 = vmatpush1.bf16.msra.mxu0 0
    %1074 = vmatprep.subr.bf16.mxu0 0
    %1075 = vmatpush1.bf16.msra.mxu0 0
    %1076 = vmatprep.subr.bf16.mxu0 0
    %1077 = vmatpush1.bf16.msra.mxu0 0
    %1078 = vmatprep.subr.bf16.mxu0 0
    %1079 = vmatpush1.bf16.msra.mxu0 0
    %1080 = vmatprep.subr.bf16.mxu0 0
    %1081 = vmatpush1.bf16.msra.mxu0 0
    %1082 = vmatprep.subr.bf16.mxu0 0
    %1083 = vmatpush1.bf16.msra.mxu0 0
    %1084 = vmatprep.subr.bf16.mxu0 0
    %1085 = vmatpush1.bf16.msra.mxu0 %v1067
    %1086 = vmatprep.subr.bf16.mxu0 0
    %1087 = vmatpush1.bf16.msra.mxu0 %v1066
    %1088 = vmatprep.subr.bf16.mxu0 0
    %1089 = vmatpush2.bf16.msra.mxu0 0
    %1090 = vmatprep.subr.bf16.mxu0 0
    %1091 = vmatpush2.bf16.msra.mxu0 0
    %1092 = vmatprep.subr.bf16.mxu0 0
    %1093 = vmatpush2.bf16.msra.mxu0 0
    %1094 = vmatprep.subr.bf16.mxu0 0
    %1095 = vmatpush2.bf16.msra.mxu0 0
    %1096 = vmatprep.subr.bf16.mxu0 0
    %1097 = vmatpush2.bf16.msra.mxu0 0
    %1098 = vmatprep.subr.bf16.mxu0 0
    %1099 = vmatpush2.bf16.msra.mxu0 0
    %1100 = vmatprep.subr.bf16.mxu0 0
    %1101 = vmatpush2.bf16.msra.mxu0 0
    %1102 = vmatprep.subr.bf16.mxu0 0
    %1103 = vmatpush2.bf16.msra.mxu0 0
    %1104 = vmatprep.mubr.bf16.mxu0 0
    %1105 = vmatmul.mubr.bf16.gmra.mxu0 %v1070
    %v1106 = vpop.f32.mrf.mxu0
    %v1107 = vadd.f32 %v132, %v1106
    %v1108 = vpop.f32.mrf.mxu0
    %v1109 = vpop.f32.mrf.mxu0
    %v1110 = vpop.f32.mrf.mxu0
    %1111 = vdwg.mxu0
    %v1112 = vmax.f32 %v1107, 0.0
    %v1113 = vpack.c.bf16 %v1112, %v1112
    %v1118 = vunpack.c.l.b16 %v133
    %v1119 = vunpack.c.l.b16 %v134
    %v1120 = vunpack.c.l.b16 %v135
    %v1121 = vunpack.c.l.b16 %v136
    %v1122 = vpack.c.b16 %v1119, %v1118
    %v1123 = vpack.c.b16 %v1121, %v1120
    %vm1124 = vcmask 64512
    %v1126 = vsel %vm1124, %v1122, 0
    %v1129 = vsel %vm1124, %v1123, 0
    %vm1131 = vcmask 1043456
    %v1133 = vsel %vm1131, %v1113, 0
    %1135 = vmatprep.subr.bf16.mxu0 0
    %1136 = vmatpush1.bf16.msra.mxu0 0
    %1137 = vmatprep.subr.bf16.mxu0 0
    %1138 = vmatpush1.bf16.msra.mxu0 0
    %1139 = vmatprep.subr.bf16.mxu0 0
    %1140 = vmatpush1.bf16.msra.mxu0 0
    %1141 = vmatprep.subr.bf16.mxu0 0
    %1142 = vmatpush1.bf16.msra.mxu0 0
    %1143 = vmatprep.subr.bf16.mxu0 0
    %1144 = vmatpush1.bf16.msra.mxu0 0
    %1145 = vmatprep.subr.bf16.mxu0 0
    %1146 = vmatpush1.bf16.msra.mxu0 0
    %1147 = vmatprep.subr.bf16.mxu0 0
    %1148 = vmatpush1.bf16.msra.mxu0 0
    %1149 = vmatprep.subr.bf16.mxu0 0
    %1150 = vmatpush1.bf16.msra.mxu0 %v1133
    %1151 = vmatprep.subr.bf16.mxu0 0
    %1152 = vmatpush2.bf16.msra.mxu0 0
    %1153 = vmatprep.subr.bf16.mxu0 0
    %1154 = vmatpush2.bf16.msra.mxu0 0
    %1155 = vmatprep.subr.bf16.mxu0 0
    %1156 = vmatpush2.bf16.msra.mxu0 0
    %1157 = vmatprep.subr.bf16.mxu0 0
    %1158 = vmatpush2.bf16.msra.mxu0 0
    %1159 = vmatprep.subr.bf16.mxu0 0
    %1160 = vmatpush2.bf16.msra.mxu0 0
    %1161 = vmatprep.subr.bf16.mxu0 0
    %1162 = vmatpush2.bf16.msra.mxu0 0
    %1163 = vmatprep.subr.bf16.mxu0 0
    %1164 = vmatpush2.bf16.msra.mxu0 0
    %1165 = vmatprep.subr.bf16.mxu0 0
    %1166 = vmatpush2.bf16.msra.mxu0 0
    %1167 = vmatprep.mubr.bf16.mxu0 0
    %1168 = vmatmul.mubr.bf16.gmra.mxu0 %v1126
    %v1169 = vpop.f32.mrf.mxu0
    %v1170 = vadd.f32 %v63, %v1169
    %v1171 = vpop.f32.mrf.mxu0
    %v1172 = vpop.f32.mrf.mxu0
    %v1173 = vadd.f32 %v64, %v1172
    %v1174 = vpop.f32.mrf.mxu0
    %1175 = vmatprep.mubr.bf16.mxu0 0
    %1176 = vmatmul.mubr.bf16.gmra.mxu0 %v1129
    %v1177 = vpop.f32.mrf.mxu0
    %v1178 = vadd.f32 %v65, %v1177
    %v1179 = vpop.f32.mrf.mxu0
    %v1180 = vpop.f32.mrf.mxu0
    %v1181 = vadd.f32 %v66, %v1180
    %v1182 = vpop.f32.mrf.mxu0
    %1183 = vdwg.mxu0
    %v1184 = vxor.u32 %v1170, 2147483648
    %v1185 = vxor.u32 %v1173, 2147483648
    %v1186 = vxor.u32 %v1178, 2147483648
    %v1187 = vxor.u32 %v1181, 2147483648
    %v1188 = vmul.f32 %v1184, 1.442695
    %v1189 = vpow.pop %v1188
    %v1190 = vmul.f32 %v1185, 1.442695
    %v1191 = vpow.pop %v1190
    %v1192 = vmul.f32 %v1186, 1.442695
    %v1193 = vpow.pop %v1192
    %v1194 = vmul.f32 %v1187, 1.442695
    %v1195 = vpow.pop %v1194
    %v1196 = vadd.f32 %v1189, 1.0
    %v1197 = vadd.f32 %v1191, 1.0
    %v1198 = vadd.f32 %v1193, 1.0
    %v1199 = vadd.f32 %v1195, 1.0
    %v1200 = vrcp.pop %v1196
    %v1201 = vmul.f32 1.0, %v1200
    %v1202 = vrcp.pop %v1197
    %v1203 = vmul.f32 1.0, %v1202
    %v1204 = vrcp.pop %v1198
    %v1205 = vmul.f32 1.0, %v1204
    %v1206 = vrcp.pop %v1199
    %v1207 = vmul.f32 1.0, %v1206
    %1209 = vset.pattern.permute.xlu0 0
    %1210 = vperm.xlu0 %1209, %v1201
    %v1211 = vpop.permute.xlu0 %1210
    %1214 = vset.pattern.permute.xlu0 0
    %1215 = vperm.xlu0 %1214, %v1203
    %v1216 = vpop.permute.xlu0 %1215
    %1219 = vset.pattern.permute.xlu0 0
    %1220 = vperm.xlu0 %1219, %v1205
    %v1221 = vpop.permute.xlu0 %1220
    %1224 = vset.pattern.permute.xlu0 0
    %1225 = vperm.xlu0 %1224, %v1207
    %v1226 = vpop.permute.xlu0 %1225
    %v1228 = vmul.f32 %v1041, %v1211
    %v1229 = vmul.f32 %v1042, %v1211
    %v1230 = vmul.f32 %v1043, %v1216
    %v1231 = vmul.f32 %v1044, %v1216
    %v1232 = vmul.f32 %v1045, %v1221
    %v1233 = vmul.f32 %v1046, %v1221
    %v1234 = vmul.f32 %v1047, %v1226
    %v1235 = vmul.f32 %v1048, %v1226
    %v1236 = vadd.f32 %v1228, 3.0
    %v1237 = vadd.f32 %v1229, 3.0
    %v1238 = vadd.f32 %v1230, 3.0
    %v1239 = vadd.f32 %v1231, 3.0
    %v1240 = vadd.f32 %v1232, 3.0
    %v1241 = vadd.f32 %v1233, 3.0
    %v1242 = vadd.f32 %v1234, 3.0
    %v1243 = vadd.f32 %v1235, 3.0
    %v1244 = vmax.f32 %v1236, 0.0
    %v1245 = vmax.f32 %v1237, 0.0
    %v1246 = vmax.f32 %v1238, 0.0
    %v1247 = vmax.f32 %v1239, 0.0
    %v1248 = vmax.f32 %v1240, 0.0
    %v1249 = vmax.f32 %v1241, 0.0
    %v1250 = vmax.f32 %v1242, 0.0
    %v1251 = vmax.f32 %v1243, 0.0
    %v1252 = vmin.f32 %v1244, 6.0
    %v1253 = vmin.f32 %v1245, 6.0
    %v1254 = vmin.f32 %v1246, 6.0
    %v1255 = vmin.f32 %v1247, 6.0
    %v1256 = vmin.f32 %v1248, 6.0
    %v1257 = vmin.f32 %v1249, 6.0
    %v1258 = vmin.f32 %v1250, 6.0
    %v1259 = vmin.f32 %v1251, 6.0
    %v1260 = vmul.f32 %v1228, %v1252
    %v1261 = vmul.f32 %v1229, %v1253
    %v1262 = vmul.f32 %v1230, %v1254
    %v1263 = vmul.f32 %v1231, %v1255
    %v1264 = vmul.f32 %v1232, %v1256
    %v1265 = vmul.f32 %v1233, %v1257
    %v1266 = vmul.f32 %v1234, %v1258
    %v1267 = vmul.f32 %v1235, %v1259
    %v1268 = vmul.f32 %v1260, 0.16666667
    %v1269 = vmul.f32 %v1261, 0.16666667
    %v1270 = vmul.f32 %v1262, 0.16666667
    %v1271 = vmul.f32 %v1263, 0.16666667
    %v1272 = vmul.f32 %v1264, 0.16666667
    %v1273 = vmul.f32 %v1265, 0.16666667
    %v1274 = vmul.f32 %v1266, 0.16666667
    %v1275 = vmul.f32 %v1267, 0.16666667
    %v1276 = vpack.c.bf16 %v1270, %v1268
    %v1277 = vpack.c.bf16 %v1271, %v1269
    %v1278 = vpack.c.bf16 %v1274, %v1272
    %v1279 = vpack.c.bf16 %v1275, %v1273
    %v1282 = vunpack.c.l.b16 %v41
    %v1283 = vunpack.c.l.b16 %v42
    %v1284 = vpack.c.b16 %v1283, %v1282
    %v1286 = vsel %vm1068, %v1284, 0
    %1288 = vmatprep.subr.bf16.mxu0 0
    %1289 = vmatpush1.bf16.msra.mxu0 0
    %1290 = vmatprep.subr.bf16.mxu0 0
    %1291 = vmatpush1.bf16.msra.mxu0 0
    %1292 = vmatprep.subr.bf16.mxu0 0
    %1293 = vmatpush1.bf16.msra.mxu0 0
    %1294 = vmatprep.subr.bf16.mxu0 0
    %1295 = vmatpush1.bf16.msra.mxu0 0
    %1296 = vmatprep.subr.bf16.mxu0 0
    %1297 = vmatpush1.bf16.msra.mxu0 0
    %1298 = vmatprep.subr.bf16.mxu0 0
    %1299 = vmatpush1.bf16.msra.mxu0 0
    %1300 = vmatprep.subr.bf16.mxu0 %v1279
    %1301 = vmatpush1.bf16.msra.mxu0 %v1278
    %1302 = vmatprep.subr.bf16.mxu0 %v1277
    %1303 = vmatpush1.bf16.msra.mxu0 %v1276
    %1304 = vmatprep.subr.bf16.mxu0 0
    %1305 = vmatpush2.bf16.msra.mxu0 0
    %1306 = vmatprep.subr.bf16.mxu0 0
    %1307 = vmatpush2.bf16.msra.mxu0 0
    %1308 = vmatprep.subr.bf16.mxu0 0
    %1309 = vmatpush2.bf16.msra.mxu0 0
    %1310 = vmatprep.subr.bf16.mxu0 0
    %1311 = vmatpush2.bf16.msra.mxu0 0
    %1312 = vmatprep.subr.bf16.mxu0 0
    %1313 = vmatpush2.bf16.msra.mxu0 0
    %1314 = vmatprep.subr.bf16.mxu0 0
    %1315 = vmatpush2.bf16.msra.mxu0 0
    %1316 = vmatprep.subr.bf16.mxu0 0
    %1317 = vmatpush2.bf16.msra.mxu0 0
    %1318 = vmatprep.subr.bf16.mxu0 0
    %1319 = vmatpush2.bf16.msra.mxu0 0
    %1320 = vmatprep.mubr.bf16.mxu0 0
    %1321 = vmatmul.mubr.bf16.gmra.mxu0 %v1286
    %v1322 = vpop.f32.mrf.mxu0
    %v1323 = vadd.f32 0.0, %v1322
    %v1324 = vpop.f32.mrf.mxu0
    %v1325 = vadd.f32 0.0, %v1324
    %v1326 = vpop.f32.mrf.mxu0
    %v1327 = vadd.f32 0.0, %v1326
    %v1328 = vpop.f32.mrf.mxu0
    %v1329 = vadd.f32 0.0, %v1328
    %1330 = vdwg.mxu0
    %1332 = vset.pattern.permute.xlu0 0
    %1333 = vperm.xlu0 %1332, %v67
    %v1334 = vpop.permute.xlu0 %1333
    %1337 = vset.pattern.permute.xlu0 0
    %1338 = vperm.xlu0 %1337, %v68
    %v1339 = vpop.permute.xlu0 %1338
    %v1341 = vmul.f32 %v1323, %v1334
    %v1342 = vmul.f32 %v1325, %v1334
    %v1343 = vmul.f32 %v1327, %v1339
    %v1344 = vmul.f32 %v1329, %v1339
    %1346 = vset.pattern.permute.xlu0 0
    %1347 = vperm.xlu0 %1346, %v70
    %v1348 = vpop.permute.xlu0 %1347
    %1351 = vset.pattern.permute.xlu0 0
    %1352 = vperm.xlu0 %1351, %v71
    %v1353 = vpop.permute.xlu0 %1352
    %v1355 = vadd.f32 %v1341, %v1348
    %v1356 = vadd.f32 %v1342, %v1348
    %v1357 = vadd.f32 %v1343, %v1353
    %v1358 = vadd.f32 %v1344, %v1353
    %v1359 = vunpack.c.l.bf16 %v137
    %v1360 = vunpack.c.h.bf16 %v137
    %v1361 = vunpack.c.l.bf16 %v138
    %v1362 = vunpack.c.h.bf16 %v138
    %v1363 = vadd.f32 %v1355, %v1359
    %v1364 = vadd.f32 %v1356, %v1360
    %v1365 = vadd.f32 %v1357, %v1361
    %v1366 = vadd.f32 %v1358, %v1362
    %1367 = vst [vmem:[#allocation2] sm:$0xff] %v1363
    %1368 = vst [vmem:[#allocation2 + $0x8] sm:$0xff] %v1364
    %1369 = vst [vmem:[#allocation2 + $0x10] sm:$0xff] %v1365
    %1370 = vst [vmem:[#allocation2 + $0x18] sm:$0xff] %v1366
    %s1371 = scalar_lea.vmem %s0, 16
    %v1372 = vld [vmem:[%s1371] sm:$0xff]
    %v1373 = vld [vmem:[%s1371 + $0x8] sm:$0xff]
    %v1376 = vunpack.c.l.b16 %v1372
    %v1377 = vunpack.c.h.b16 %v1372
    %v1378 = vunpack.c.l.b16 %v1373
    %v1379 = vunpack.c.h.b16 %v1373
    %v1380 = vpack.c.b16 %v1378, %v1376
    %v1381 = vpack.c.b16 %v1379, %v1377
    %1384 = vmatprep.subr.bf16.mxu0 0
    %1385 = vmatpush1.bf16.msra.mxu0 0
    %1386 = vmatprep.subr.bf16.mxu0 0
    %1387 = vmatpush1.bf16.msra.mxu0 0
    %1388 = vmatprep.subr.bf16.mxu0 0
    %1389 = vmatpush1.bf16.msra.mxu0 0
    %1390 = vmatprep.subr.bf16.mxu0 0
    %1391 = vmatpush1.bf16.msra.mxu0 0
    %1392 = vmatprep.subr.bf16.mxu0 0
    %1393 = vmatpush1.bf16.msra.mxu0 0
    %1394 = vmatprep.subr.bf16.mxu0 0
    %1395 = vmatpush1.bf16.msra.mxu0 0
    %1396 = vmatprep.subr.bf16.mxu0 0
    %1397 = vmatpush1.bf16.msra.mxu0 0
    %1398 = vmatprep.subr.bf16.mxu0 %v1381
    %1399 = vmatpush1.bf16.msra.mxu0 %v1380
    %1400 = vmatprep.subr.bf16.mxu0 0
    %1401 = vmatpush2.bf16.msra.mxu0 0
    %1402 = vmatprep.subr.bf16.mxu0 0
    %1403 = vmatpush2.bf16.msra.mxu0 0
    %1404 = vmatprep.subr.bf16.mxu0 0
    %1405 = vmatpush2.bf16.msra.mxu0 0
    %1406 = vmatprep.subr.bf16.mxu0 0
    %1407 = vmatpush2.bf16.msra.mxu0 0
    %1408 = vmatprep.subr.bf16.mxu0 0
    %1409 = vmatpush2.bf16.msra.mxu0 0
    %1410 = vmatprep.subr.bf16.mxu0 0
    %1411 = vmatpush2.bf16.msra.mxu0 0
    %1412 = vmatprep.subr.bf16.mxu0 0
    %1413 = vmatpush2.bf16.msra.mxu0 0
    %1414 = vmatprep.subr.bf16.mxu0 0
    %1415 = vmatpush2.bf16.msra.mxu0 0
    %1416 = vmatprep.mubr.bf16.mxu0 0
    %1417 = vmatmul.mubr.bf16.gmra.mxu0 %v161
    %v1418 = vpop.f32.mrf.mxu0
    %v1419 = vadd.f32 0.0, %v1418
    %v1420 = vpop.f32.mrf.mxu0
    %v1421 = vadd.f32 0.0, %v1420
    %v1422 = vpop.f32.mrf.mxu0
    %v1423 = vadd.f32 0.0, %v1422
    %v1424 = vpop.f32.mrf.mxu0
    %v1425 = vadd.f32 0.0, %v1424
    %1426 = vmatprep.mubr.bf16.mxu0 0
    %1427 = vmatmul.mubr.bf16.gmra.mxu0 %v164
    %v1428 = vpop.f32.mrf.mxu0
    %v1429 = vadd.f32 0.0, %v1428
    %v1430 = vpop.f32.mrf.mxu0
    %v1431 = vadd.f32 0.0, %v1430
    %v1432 = vpop.f32.mrf.mxu0
    %v1433 = vadd.f32 0.0, %v1432
    %v1434 = vpop.f32.mrf.mxu0
    %v1435 = vadd.f32 0.0, %v1434
    %1436 = vdwg.mxu0
    %v1437 = vmul.f32 %v1419, %v222
    %v1438 = vmul.f32 %v1421, %v222
    %v1439 = vmul.f32 %v1423, %v227
    %v1440 = vmul.f32 %v1425, %v227
    %v1441 = vmul.f32 %v1429, %v232
    %v1442 = vmul.f32 %v1431, %v232
    %v1443 = vmul.f32 %v1433, %v237
    %v1444 = vmul.f32 %v1435, %v237
    %v1445 = vadd.f32 %v1437, %v250
    %v1446 = vadd.f32 %v1438, %v250
    %v1447 = vadd.f32 %v1439, %v255
    %v1448 = vadd.f32 %v1440, %v255
    %v1449 = vadd.f32 %v1441, %v260
    %v1450 = vadd.f32 %v1442, %v260
    %v1451 = vadd.f32 %v1443, %v265
    %v1452 = vadd.f32 %v1444, %v265
    %v1453 = vadd.f32 %v1445, 3.0
    %v1454 = vadd.f32 %v1446, 3.0
    %v1455 = vadd.f32 %v1447, 3.0
    %v1456 = vadd.f32 %v1448, 3.0
    %v1457 = vadd.f32 %v1449, 3.0
    %v1458 = vadd.f32 %v1450, 3.0
    %v1459 = vadd.f32 %v1451, 3.0
    %v1460 = vadd.f32 %v1452, 3.0
    %v1461 = vmax.f32 %v1453, 0.0
    %v1462 = vmax.f32 %v1454, 0.0
    %v1463 = vmax.f32 %v1455, 0.0
    %v1464 = vmax.f32 %v1456, 0.0
    %v1465 = vmax.f32 %v1457, 0.0
    %v1466 = vmax.f32 %v1458, 0.0
    %v1467 = vmax.f32 %v1459, 0.0
    %v1468 = vmax.f32 %v1460, 0.0
    %v1469 = vmin.f32 %v1461, 6.0
    %v1470 = vmin.f32 %v1462, 6.0
    %v1471 = vmin.f32 %v1463, 6.0
    %v1472 = vmin.f32 %v1464, 6.0
    %v1473 = vmin.f32 %v1465, 6.0
    %v1474 = vmin.f32 %v1466, 6.0
    %v1475 = vmin.f32 %v1467, 6.0
    %v1476 = vmin.f32 %v1468, 6.0
    %v1477 = vmul.f32 %v1445, %v1469
    %v1478 = vmul.f32 %v1446, %v1470
    %v1479 = vmul.f32 %v1447, %v1471
    %v1480 = vmul.f32 %v1448, %v1472
    %v1481 = vmul.f32 %v1449, %v1473
    %v1482 = vmul.f32 %v1450, %v1474
    %v1483 = vmul.f32 %v1451, %v1475
    %v1484 = vmul.f32 %v1452, %v1476
    %v1485 = vmul.f32 %v1477, 0.16666667
    %v1486 = vmul.f32 %v1478, 0.16666667
    %v1487 = vmul.f32 %v1479, 0.16666667
    %v1488 = vmul.f32 %v1480, 0.16666667
    %v1489 = vmul.f32 %v1481, 0.16666667
    %v1490 = vmul.f32 %v1482, 0.16666667
    %v1491 = vmul.f32 %v1483, 0.16666667
    %v1492 = vmul.f32 %v1484, 0.16666667
    %1493 = vrot.lane.b32.xlu0 %v1485, 17
    %v1494 = vpop.permute.xlu0 %1493
    %1495 = vrot.lane.b32.xlu0 %v1487, 17
    %v1496 = vpop.permute.xlu0 %1495
    %1497 = vrot.lane.b32.xlu0 %v1489, 17
    %v1498 = vpop.permute.xlu0 %1497
    %1499 = vrot.lane.b32.xlu0 %v1491, 17
    %v1500 = vpop.permute.xlu0 %1499
    %1501 = vrot.lane.b32.xlu0 %v1486, 17
    %v1502 = vpop.permute.xlu0 %1501
    %1503 = vrot.lane.b32.xlu0 %v1488, 17
    %v1504 = vpop.permute.xlu0 %1503
    %1505 = vrot.lane.b32.xlu0 %v1490, 17
    %v1506 = vpop.permute.xlu0 %1505
    %1507 = vrot.lane.b32.xlu0 %v1492, 17
    %v1508 = vpop.permute.xlu0 %1507
    %v1509 = vsel %vm333, %v1494, %v1502
    %v1510 = vsel %vm333, %v1496, %v1504
    %v1511 = vsel %vm333, %v1498, %v1506
    %v1512 = vsel %vm333, %v1500, %v1508
    %v1513 = vsel %vm333, %v1502, %v1494
    %v1514 = vsel %vm333, %v1504, %v1496
    %v1515 = vsel %vm333, %v1506, %v1498
    %v1516 = vsel %vm333, %v1508, %v1500
    %v1517 = vmul.f32 %v1513, %v346
    %v1518 = vmul.f32 %v1509, %v350
    %v1519 = vmul.f32 %v1514, %v346
    %v1520 = vmul.f32 %v1510, %v350
    %v1521 = vmul.f32 %v1515, %v346
    %v1522 = vmul.f32 %v1511, %v350
    %v1523 = vmul.f32 %v1516, %v346
    %v1524 = vmul.f32 %v1512, %v350
    %v1525 = vmul.f32 %v1517, %v364
    %v1526 = vmul.f32 %v1518, %v364
    %v1527 = vmul.f32 %v1519, %v369
    %v1528 = vmul.f32 %v1520, %v369
    %v1529 = vmul.f32 %v1521, %v374
    %v1530 = vmul.f32 %v1522, %v374
    %v1531 = vmul.f32 %v1523, %v379
    %v1532 = vmul.f32 %v1524, %v379
    %v1533 = vadd.f32 %v1525, 0.0
    %v1534 = vadd.f32 %v1526, 0.0
    %v1535 = vadd.f32 %v1527, 0.0
    %v1536 = vadd.f32 %v1528, 0.0
    %v1537 = vadd.f32 %v1529, 0.0
    %v1538 = vadd.f32 %v1530, 0.0
    %v1539 = vadd.f32 %v1531, 0.0
    %v1540 = vadd.f32 %v1532, 0.0
    %1541 = vrot.lane.b32.xlu0 %v1485, 16
    %v1542 = vpop.permute.xlu0 %1541
    %1543 = vrot.lane.b32.xlu0 %v1487, 16
    %v1544 = vpop.permute.xlu0 %1543
    %1545 = vrot.lane.b32.xlu0 %v1489, 16
    %v1546 = vpop.permute.xlu0 %1545
    %1547 = vrot.lane.b32.xlu0 %v1491, 16
    %v1548 = vpop.permute.xlu0 %1547
    %1549 = vrot.lane.b32.xlu0 %v1486, 16
    %v1550 = vpop.permute.xlu0 %1549
    %1551 = vrot.lane.b32.xlu0 %v1488, 16
    %v1552 = vpop.permute.xlu0 %1551
    %1553 = vrot.lane.b32.xlu0 %v1490, 16
    %v1554 = vpop.permute.xlu0 %1553
    %1555 = vrot.lane.b32.xlu0 %v1492, 16
    %v1556 = vpop.permute.xlu0 %1555
    %v1557 = vsel %vm413, %v1542, %v1550
    %v1558 = vsel %vm413, %v1544, %v1552
    %v1559 = vsel %vm413, %v1546, %v1554
    %v1560 = vsel %vm413, %v1548, %v1556
    %v1561 = vsel %vm413, %v1550, %v1542
    %v1562 = vsel %vm413, %v1552, %v1544
    %v1563 = vsel %vm413, %v1554, %v1546
    %v1564 = vsel %vm413, %v1556, %v1548
    %v1565 = vmul.f32 %v1561, %v426
    %v1566 = vmul.f32 %v1557, %v430
    %v1567 = vmul.f32 %v1562, %v426
    %v1568 = vmul.f32 %v1558, %v430
    %v1569 = vmul.f32 %v1563, %v426
    %v1570 = vmul.f32 %v1559, %v430
    %v1571 = vmul.f32 %v1564, %v426
    %v1572 = vmul.f32 %v1560, %v430
    %v1573 = vmul.f32 %v1565, %v444
    %v1574 = vmul.f32 %v1566, %v444
    %v1575 = vmul.f32 %v1567, %v449
    %v1576 = vmul.f32 %v1568, %v449
    %v1577 = vmul.f32 %v1569, %v454
    %v1578 = vmul.f32 %v1570, %v454
    %v1579 = vmul.f32 %v1571, %v459
    %v1580 = vmul.f32 %v1572, %v459
    %v1581 = vadd.f32 %v1533, %v1573
    %v1582 = vadd.f32 %v1534, %v1574
    %v1583 = vadd.f32 %v1535, %v1575
    %v1584 = vadd.f32 %v1536, %v1576
    %v1585 = vadd.f32 %v1537, %v1577
    %v1586 = vadd.f32 %v1538, %v1578
    %v1587 = vadd.f32 %v1539, %v1579
    %v1588 = vadd.f32 %v1540, %v1580
    %1589 = vrot.lane.b32.xlu0 %v1485, 15
    %v1590 = vpop.permute.xlu0 %1589
    %1591 = vrot.lane.b32.xlu0 %v1487, 15
    %v1592 = vpop.permute.xlu0 %1591
    %1593 = vrot.lane.b32.xlu0 %v1489, 15
    %v1594 = vpop.permute.xlu0 %1593
    %1595 = vrot.lane.b32.xlu0 %v1491, 15
    %v1596 = vpop.permute.xlu0 %1595
    %1597 = vrot.lane.b32.xlu0 %v1486, 15
    %v1598 = vpop.permute.xlu0 %1597
    %1599 = vrot.lane.b32.xlu0 %v1488, 15
    %v1600 = vpop.permute.xlu0 %1599
    %1601 = vrot.lane.b32.xlu0 %v1490, 15
    %v1602 = vpop.permute.xlu0 %1601
    %1603 = vrot.lane.b32.xlu0 %v1492, 15
    %v1604 = vpop.permute.xlu0 %1603
    %v1605 = vsel %vm493, %v1590, %v1598
    %v1606 = vsel %vm493, %v1592, %v1600
    %v1607 = vsel %vm493, %v1594, %v1602
    %v1608 = vsel %vm493, %v1596, %v1604
    %v1609 = vsel %vm493, %v1598, %v1590
    %v1610 = vsel %vm493, %v1600, %v1592
    %v1611 = vsel %vm493, %v1602, %v1594
    %v1612 = vsel %vm493, %v1604, %v1596
    %v1613 = vmul.f32 %v1609, %v506
    %v1614 = vmul.f32 %v1605, %v510
    %v1615 = vmul.f32 %v1610, %v506
    %v1616 = vmul.f32 %v1606, %v510
    %v1617 = vmul.f32 %v1611, %v506
    %v1618 = vmul.f32 %v1607, %v510
    %v1619 = vmul.f32 %v1612, %v506
    %v1620 = vmul.f32 %v1608, %v510
    %v1621 = vmul.f32 %v1613, %v524
    %v1622 = vmul.f32 %v1614, %v524
    %v1623 = vmul.f32 %v1615, %v529
    %v1624 = vmul.f32 %v1616, %v529
    %v1625 = vmul.f32 %v1617, %v534
    %v1626 = vmul.f32 %v1618, %v534
    %v1627 = vmul.f32 %v1619, %v539
    %v1628 = vmul.f32 %v1620, %v539
    %v1629 = vadd.f32 %v1581, %v1621
    %v1630 = vadd.f32 %v1582, %v1622
    %v1631 = vadd.f32 %v1583, %v1623
    %v1632 = vadd.f32 %v1584, %v1624
    %v1633 = vadd.f32 %v1585, %v1625
    %v1634 = vadd.f32 %v1586, %v1626
    %v1635 = vadd.f32 %v1587, %v1627
    %v1636 = vadd.f32 %v1588, %v1628
    %1637 = vrot.lane.b32.xlu0 %v1485, 1
    %v1638 = vpop.permute.xlu0 %1637
    %1639 = vrot.lane.b32.xlu0 %v1487, 1
    %v1640 = vpop.permute.xlu0 %1639
    %1641 = vrot.lane.b32.xlu0 %v1489, 1
    %v1642 = vpop.permute.xlu0 %1641
    %1643 = vrot.lane.b32.xlu0 %v1491, 1
    %v1644 = vpop.permute.xlu0 %1643
    %1645 = vrot.lane.b32.xlu0 %v1486, 1
    %v1646 = vpop.permute.xlu0 %1645
    %1647 = vrot.lane.b32.xlu0 %v1488, 1
    %v1648 = vpop.permute.xlu0 %1647
    %1649 = vrot.lane.b32.xlu0 %v1490, 1
    %v1650 = vpop.permute.xlu0 %1649
    %1651 = vrot.lane.b32.xlu0 %v1492, 1
    %v1652 = vpop.permute.xlu0 %1651
    %v1653 = vsel %vm573, %v1638, %v1646
    %v1654 = vsel %vm573, %v1640, %v1648
    %v1655 = vsel %vm573, %v1642, %v1650
    %v1656 = vsel %vm573, %v1644, %v1652
    %v1657 = vsel %vm573, %v1646, %v1638
    %v1658 = vsel %vm573, %v1648, %v1640
    %v1659 = vsel %vm573, %v1650, %v1642
    %v1660 = vsel %vm573, %v1652, %v1644
    %v1661 = vmul.f32 %v1657, %v586
    %v1662 = vmul.f32 %v1653, %v590
    %v1663 = vmul.f32 %v1658, %v586
    %v1664 = vmul.f32 %v1654, %v590
    %v1665 = vmul.f32 %v1659, %v586
    %v1666 = vmul.f32 %v1655, %v590
    %v1667 = vmul.f32 %v1660, %v586
    %v1668 = vmul.f32 %v1656, %v590
    %v1669 = vmul.f32 %v1661, %v604
    %v1670 = vmul.f32 %v1662, %v604
    %v1671 = vmul.f32 %v1663, %v609
    %v1672 = vmul.f32 %v1664, %v609
    %v1673 = vmul.f32 %v1665, %v614
    %v1674 = vmul.f32 %v1666, %v614
    %v1675 = vmul.f32 %v1667, %v619
    %v1676 = vmul.f32 %v1668, %v619
    %v1677 = vadd.f32 %v1629, %v1669
    %v1678 = vadd.f32 %v1630, %v1670
    %v1679 = vadd.f32 %v1631, %v1671
    %v1680 = vadd.f32 %v1632, %v1672
    %v1681 = vadd.f32 %v1633, %v1673
    %v1682 = vadd.f32 %v1634, %v1674
    %v1683 = vadd.f32 %v1635, %v1675
    %v1684 = vadd.f32 %v1636, %v1676
    %v1685 = vmul.f32 %v1485, %v640
    %v1686 = vmul.f32 %v1486, %v640
    %v1687 = vmul.f32 %v1487, %v645
    %v1688 = vmul.f32 %v1488, %v645
    %v1689 = vmul.f32 %v1489, %v650
    %v1690 = vmul.f32 %v1490, %v650
    %v1691 = vmul.f32 %v1491, %v655
    %v1692 = vmul.f32 %v1492, %v655
    %v1693 = vadd.f32 %v1677, %v1685
    %v1694 = vadd.f32 %v1678, %v1686
    %v1695 = vadd.f32 %v1679, %v1687
    %v1696 = vadd.f32 %v1680, %v1688
    %v1697 = vadd.f32 %v1681, %v1689
    %v1698 = vadd.f32 %v1682, %v1690
    %v1699 = vadd.f32 %v1683, %v1691
    %v1700 = vadd.f32 %v1684, %v1692
    %1701 = vrot.lane.b32.xlu0 %v1485, 127
    %v1702 = vpop.permute.xlu0 %1701
    %1703 = vrot.lane.b32.xlu0 %v1487, 127
    %v1704 = vpop.permute.xlu0 %1703
    %1705 = vrot.lane.b32.xlu0 %v1489, 127
    %v1706 = vpop.permute.xlu0 %1705
    %1707 = vrot.lane.b32.xlu0 %v1491, 127
    %v1708 = vpop.permute.xlu0 %1707
    %1709 = vrot.lane.b32.xlu0 %v1486, 127
    %v1710 = vpop.permute.xlu0 %1709
    %1711 = vrot.lane.b32.xlu0 %v1488, 127
    %v1712 = vpop.permute.xlu0 %1711
    %1713 = vrot.lane.b32.xlu0 %v1490, 127
    %v1714 = vpop.permute.xlu0 %1713
    %1715 = vrot.lane.b32.xlu0 %v1492, 127
    %v1716 = vpop.permute.xlu0 %1715
    %v1717 = vsel %vm689, %v1702, %v1710
    %v1718 = vsel %vm689, %v1704, %v1712
    %v1719 = vsel %vm689, %v1706, %v1714
    %v1720 = vsel %vm689, %v1708, %v1716
    %v1721 = vsel %vm689, %v1710, %v1702
    %v1722 = vsel %vm689, %v1712, %v1704
    %v1723 = vsel %vm689, %v1714, %v1706
    %v1724 = vsel %vm689, %v1716, %v1708
    %v1725 = vmul.f32 %v1717, %v702
    %v1726 = vmul.f32 %v1721, %v706
    %v1727 = vmul.f32 %v1718, %v702
    %v1728 = vmul.f32 %v1722, %v706
    %v1729 = vmul.f32 %v1719, %v702
    %v1730 = vmul.f32 %v1723, %v706
    %v1731 = vmul.f32 %v1720, %v702
    %v1732 = vmul.f32 %v1724, %v706
    %v1733 = vmul.f32 %v1725, %v720
    %v1734 = vmul.f32 %v1726, %v720
    %v1735 = vmul.f32 %v1727, %v725
    %v1736 = vmul.f32 %v1728, %v725
    %v1737 = vmul.f32 %v1729, %v730
    %v1738 = vmul.f32 %v1730, %v730
    %v1739 = vmul.f32 %v1731, %v735
    %v1740 = vmul.f32 %v1732, %v735
    %v1741 = vadd.f32 %v1693, %v1733
    %v1742 = vadd.f32 %v1694, %v1734
    %v1743 = vadd.f32 %v1695, %v1735
    %v1744 = vadd.f32 %v1696, %v1736
    %v1745 = vadd.f32 %v1697, %v1737
    %v1746 = vadd.f32 %v1698, %v1738
    %v1747 = vadd.f32 %v1699, %v1739
    %v1748 = vadd.f32 %v1700, %v1740
    %1749 = vrot.lane.b32.xlu0 %v1485, 113
    %v1750 = vpop.permute.xlu0 %1749
    %1751 = vrot.lane.b32.xlu0 %v1487, 113
    %v1752 = vpop.permute.xlu0 %1751
    %1753 = vrot.lane.b32.xlu0 %v1489, 113
    %v1754 = vpop.permute.xlu0 %1753
    %1755 = vrot.lane.b32.xlu0 %v1491, 113
    %v1756 = vpop.permute.xlu0 %1755
    %1757 = vrot.lane.b32.xlu0 %v1486, 113
    %v1758 = vpop.permute.xlu0 %1757
    %1759 = vrot.lane.b32.xlu0 %v1488, 113
    %v1760 = vpop.permute.xlu0 %1759
    %1761 = vrot.lane.b32.xlu0 %v1490, 113
    %v1762 = vpop.permute.xlu0 %1761
    %1763 = vrot.lane.b32.xlu0 %v1492, 113
    %v1764 = vpop.permute.xlu0 %1763
    %v1765 = vsel %vm769, %v1750, %v1758
    %v1766 = vsel %vm769, %v1752, %v1760
    %v1767 = vsel %vm769, %v1754, %v1762
    %v1768 = vsel %vm769, %v1756, %v1764
    %v1769 = vsel %vm769, %v1758, %v1750
    %v1770 = vsel %vm769, %v1760, %v1752
    %v1771 = vsel %vm769, %v1762, %v1754
    %v1772 = vsel %vm769, %v1764, %v1756
    %v1773 = vmul.f32 %v1765, %v782
    %v1774 = vmul.f32 %v1769, %v786
    %v1775 = vmul.f32 %v1766, %v782
    %v1776 = vmul.f32 %v1770, %v786
    %v1777 = vmul.f32 %v1767, %v782
    %v1778 = vmul.f32 %v1771, %v786
    %v1779 = vmul.f32 %v1768, %v782
    %v1780 = vmul.f32 %v1772, %v786
    %v1781 = vmul.f32 %v1773, %v800
    %v1782 = vmul.f32 %v1774, %v800
    %v1783 = vmul.f32 %v1775, %v805
    %v1784 = vmul.f32 %v1776, %v805
    %v1785 = vmul.f32 %v1777, %v810
    %v1786 = vmul.f32 %v1778, %v810
    %v1787 = vmul.f32 %v1779, %v815
    %v1788 = vmul.f32 %v1780, %v815
    %v1789 = vadd.f32 %v1741, %v1781
    %v1790 = vadd.f32 %v1742, %v1782
    %v1791 = vadd.f32 %v1743, %v1783
    %v1792 = vadd.f32 %v1744, %v1784
    %v1793 = vadd.f32 %v1745, %v1785
    %v1794 = vadd.f32 %v1746, %v1786
    %v1795 = vadd.f32 %v1747, %v1787
    %v1796 = vadd.f32 %v1748, %v1788
    %1797 = vrot.lane.b32.xlu0 %v1485, 112
    %v1798 = vpop.permute.xlu0 %1797
    %1799 = vrot.lane.b32.xlu0 %v1487, 112
    %v1800 = vpop.permute.xlu0 %1799
    %1801 = vrot.lane.b32.xlu0 %v1489, 112
    %v1802 = vpop.permute.xlu0 %1801
    %1803 = vrot.lane.b32.xlu0 %v1491, 112
    %v1804 = vpop.permute.xlu0 %1803
    %1805 = vrot.lane.b32.xlu0 %v1486, 112
    %v1806 = vpop.permute.xlu0 %1805
    %1807 = vrot.lane.b32.xlu0 %v1488, 112
    %v1808 = vpop.permute.xlu0 %1807
    %1809 = vrot.lane.b32.xlu0 %v1490, 112
    %v1810 = vpop.permute.xlu0 %1809
    %1811 = vrot.lane.b32.xlu0 %v1492, 112
    %v1812 = vpop.permute.xlu0 %1811
    %v1813 = vsel %vm849, %v1798, %v1806
    %v1814 = vsel %vm849, %v1800, %v1808
    %v1815 = vsel %vm849, %v1802, %v1810
    %v1816 = vsel %vm849, %v1804, %v1812
    %v1817 = vsel %vm849, %v1806, %v1798
    %v1818 = vsel %vm849, %v1808, %v1800
    %v1819 = vsel %vm849, %v1810, %v1802
    %v1820 = vsel %vm849, %v1812, %v1804
    %v1821 = vmul.f32 %v1813, %v862
    %v1822 = vmul.f32 %v1817, %v866
    %v1823 = vmul.f32 %v1814, %v862
    %v1824 = vmul.f32 %v1818, %v866
    %v1825 = vmul.f32 %v1815, %v862
    %v1826 = vmul.f32 %v1819, %v866
    %v1827 = vmul.f32 %v1816, %v862
    %v1828 = vmul.f32 %v1820, %v866
    %v1829 = vmul.f32 %v1821, %v880
    %v1830 = vmul.f32 %v1822, %v880
    %v1831 = vmul.f32 %v1823, %v885
    %v1832 = vmul.f32 %v1824, %v885
    %v1833 = vmul.f32 %v1825, %v890
    %v1834 = vmul.f32 %v1826, %v890
    %v1835 = vmul.f32 %v1827, %v895
    %v1836 = vmul.f32 %v1828, %v895
    %v1837 = vadd.f32 %v1789, %v1829
    %v1838 = vadd.f32 %v1790, %v1830
    %v1839 = vadd.f32 %v1791, %v1831
    %v1840 = vadd.f32 %v1792, %v1832
    %v1841 = vadd.f32 %v1793, %v1833
    %v1842 = vadd.f32 %v1794, %v1834
    %v1843 = vadd.f32 %v1795, %v1835
    %v1844 = vadd.f32 %v1796, %v1836
    %1845 = vrot.lane.b32.xlu0 %v1485, 111
    %v1846 = vpop.permute.xlu0 %1845
    %1847 = vrot.lane.b32.xlu0 %v1487, 111
    %v1848 = vpop.permute.xlu0 %1847
    %1849 = vrot.lane.b32.xlu0 %v1489, 111
    %v1850 = vpop.permute.xlu0 %1849
    %1851 = vrot.lane.b32.xlu0 %v1491, 111
    %v1852 = vpop.permute.xlu0 %1851
    %1853 = vrot.lane.b32.xlu0 %v1486, 111
    %v1854 = vpop.permute.xlu0 %1853
    %1855 = vrot.lane.b32.xlu0 %v1488, 111
    %v1856 = vpop.permute.xlu0 %1855
    %1857 = vrot.lane.b32.xlu0 %v1490, 111
    %v1858 = vpop.permute.xlu0 %1857
    %1859 = vrot.lane.b32.xlu0 %v1492, 111
    %v1860 = vpop.permute.xlu0 %1859
    %v1861 = vsel %vm929, %v1846, %v1854
    %v1862 = vsel %vm929, %v1848, %v1856
    %v1863 = vsel %vm929, %v1850, %v1858
    %v1864 = vsel %vm929, %v1852, %v1860
    %v1865 = vsel %vm929, %v1854, %v1846
    %v1866 = vsel %vm929, %v1856, %v1848
    %v1867 = vsel %vm929, %v1858, %v1850
    %v1868 = vsel %vm929, %v1860, %v1852
    %v1869 = vmul.f32 %v1861, %v942
    %v1870 = vmul.f32 %v1865, %v946
    %v1871 = vmul.f32 %v1862, %v942
    %v1872 = vmul.f32 %v1866, %v946
    %v1873 = vmul.f32 %v1863, %v942
    %v1874 = vmul.f32 %v1867, %v946
    %v1875 = vmul.f32 %v1864, %v942
    %v1876 = vmul.f32 %v1868, %v946
    %v1877 = vmul.f32 %v1869, %v960
    %v1878 = vmul.f32 %v1870, %v960
    %v1879 = vmul.f32 %v1871, %v965
    %v1880 = vmul.f32 %v1872, %v965
    %v1881 = vmul.f32 %v1873, %v970
    %v1882 = vmul.f32 %v1874, %v970
    %v1883 = vmul.f32 %v1875, %v975
    %v1884 = vmul.f32 %v1876, %v975
    %v1885 = vadd.f32 %v1837, %v1877
    %v1886 = vadd.f32 %v1838, %v1878
    %v1887 = vadd.f32 %v1839, %v1879
    %v1888 = vadd.f32 %v1840, %v1880
    %v1889 = vadd.f32 %v1841, %v1881
    %v1890 = vadd.f32 %v1842, %v1882
    %v1891 = vadd.f32 %v1843, %v1883
    %v1892 = vadd.f32 %v1844, %v1884
    %v1893 = vmul.f32 %v1885, %v996
    %v1894 = vmul.f32 %v1886, %v996
    %v1895 = vmul.f32 %v1887, %v1001
    %v1896 = vmul.f32 %v1888, %v1001
    %v1897 = vmul.f32 %v1889, %v1006
    %v1898 = vmul.f32 %v1890, %v1006
    %v1899 = vmul.f32 %v1891, %v1011
    %v1900 = vmul.f32 %v1892, %v1011
    %v1901 = vadd.f32 %v1893, %v1024
    %v1902 = vadd.f32 %v1894, %v1024
    %v1903 = vadd.f32 %v1895, %v1029
    %v1904 = vadd.f32 %v1896, %v1029
    %v1905 = vadd.f32 %v1897, %v1034
    %v1906 = vadd.f32 %v1898, %v1034
    %v1907 = vadd.f32 %v1899, %v1039
    %v1908 = vadd.f32 %v1900, %v1039
    %v1909 = vadd.f32 %v1901, %v1902
    %1910 = vadd.xlane.f32.xlu0 %v1909
    %v1911 = vpop.xlane.xlu0 %1910
    %v1912 = vadd.f32 %v1903, %v1904
    %1913 = vadd.xlane.f32.xlu0 %v1912
    %v1914 = vpop.xlane.xlu0 %1913
    %v1915 = vadd.f32 %v1905, %v1906
    %1916 = vadd.xlane.f32.xlu0 %v1915
    %v1917 = vpop.xlane.xlu0 %1916
    %v1918 = vadd.f32 %v1907, %v1908
    %1919 = vadd.xlane.f32.xlu0 %v1918
    %v1920 = vpop.xlane.xlu0 %1919
    %v1921 = vmul.f32 %v1911, %v1061
    %v1922 = vmul.f32 %v1914, %v1061
    %v1923 = vmul.f32 %v1917, %v1061
    %v1924 = vmul.f32 %v1920, %v1061
    %v1925 = vpack.c.bf16 %v1922, %v1921
    %v1926 = vpack.c.bf16 %v1924, %v1923
    %1927 = vmatprep.subr.bf16.mxu0 0
    %1928 = vmatpush1.bf16.msra.mxu0 0
    %1929 = vmatprep.subr.bf16.mxu0 0
    %1930 = vmatpush1.bf16.msra.mxu0 0
    %1931 = vmatprep.subr.bf16.mxu0 0
    %1932 = vmatpush1.bf16.msra.mxu0 0
    %1933 = vmatprep.subr.bf16.mxu0 0
    %1934 = vmatpush1.bf16.msra.mxu0 0
    %1935 = vmatprep.subr.bf16.mxu0 0
    %1936 = vmatpush1.bf16.msra.mxu0 0
    %1937 = vmatprep.subr.bf16.mxu0 0
    %1938 = vmatpush1.bf16.msra.mxu0 0
    %1939 = vmatprep.subr.bf16.mxu0 0
    %1940 = vmatpush1.bf16.msra.mxu0 %v1926
    %1941 = vmatprep.subr.bf16.mxu0 0
    %1942 = vmatpush1.bf16.msra.mxu0 %v1925
    %1943 = vmatprep.subr.bf16.mxu0 0
    %1944 = vmatpush2.bf16.msra.mxu0 0
    %1945 = vmatprep.subr.bf16.mxu0 0
    %1946 = vmatpush2.bf16.msra.mxu0 0
    %1947 = vmatprep.subr.bf16.mxu0 0
    %1948 = vmatpush2.bf16.msra.mxu0 0
    %1949 = vmatprep.subr.bf16.mxu0 0
    %1950 = vmatpush2.bf16.msra.mxu0 0
    %1951 = vmatprep.subr.bf16.mxu0 0
    %1952 = vmatpush2.bf16.msra.mxu0 0
    %1953 = vmatprep.subr.bf16.mxu0 0
    %1954 = vmatpush2.bf16.msra.mxu0 0
    %1955 = vmatprep.subr.bf16.mxu0 0
    %1956 = vmatpush2.bf16.msra.mxu0 0
    %1957 = vmatprep.subr.bf16.mxu0 0
    %1958 = vmatpush2.bf16.msra.mxu0 0
    %1959 = vmatprep.mubr.bf16.mxu0 0
    %1960 = vmatmul.mubr.bf16.gmra.mxu0 %v1070
    %v1961 = vpop.f32.mrf.mxu0
    %v1962 = vadd.f32 %v132, %v1961
    %v1963 = vpop.f32.mrf.mxu0
    %v1964 = vpop.f32.mrf.mxu0
    %v1965 = vpop.f32.mrf.mxu0
    %1966 = vdwg.mxu0
    %v1967 = vmax.f32 %v1962, 0.0
    %v1968 = vpack.c.bf16 %v1967, %v1967
    %v1970 = vsel %vm1131, %v1968, 0
    %1972 = vmatprep.subr.bf16.mxu0 0
    %1973 = vmatpush1.bf16.msra.mxu0 0
    %1974 = vmatprep.subr.bf16.mxu0 0
    %1975 = vmatpush1.bf16.msra.mxu0 0
    %1976 = vmatprep.subr.bf16.mxu0 0
    %1977 = vmatpush1.bf16.msra.mxu0 0
    %1978 = vmatprep.subr.bf16.mxu0 0
    %1979 = vmatpush1.bf16.msra.mxu0 0
    %1980 = vmatprep.subr.bf16.mxu0 0
    %1981 = vmatpush1.bf16.msra.mxu0 0
    %1982 = vmatprep.subr.bf16.mxu0 0
    %1983 = vmatpush1.bf16.msra.mxu0 0
    %1984 = vmatprep.subr.bf16.mxu0 0
    %1985 = vmatpush1.bf16.msra.mxu0 0
    %1986 = vmatprep.subr.bf16.mxu0 0
    %1987 = vmatpush1.bf16.msra.mxu0 %v1970
    %1988 = vmatprep.subr.bf16.mxu0 0
    %1989 = vmatpush2.bf16.msra.mxu0 0
    %1990 = vmatprep.subr.bf16.mxu0 0
    %1991 = vmatpush2.bf16.msra.mxu0 0
    %1992 = vmatprep.subr.bf16.mxu0 0
    %1993 = vmatpush2.bf16.msra.mxu0 0
    %1994 = vmatprep.subr.bf16.mxu0 0
    %1995 = vmatpush2.bf16.msra.mxu0 0
    %1996 = vmatprep.subr.bf16.mxu0 0
    %1997 = vmatpush2.bf16.msra.mxu0 0
    %1998 = vmatprep.subr.bf16.mxu0 0
    %1999 = vmatpush2.bf16.msra.mxu0 0
    %2000 = vmatprep.subr.bf16.mxu0 0
    %2001 = vmatpush2.bf16.msra.mxu0 0
    %2002 = vmatprep.subr.bf16.mxu0 0
    %2003 = vmatpush2.bf16.msra.mxu0 0
    %2004 = vmatprep.mubr.bf16.mxu0 0
    %2005 = vmatmul.mubr.bf16.gmra.mxu0 %v1126
    %v2006 = vpop.f32.mrf.mxu0
    %v2007 = vadd.f32 %v63, %v2006
    %v2008 = vpop.f32.mrf.mxu0
    %v2009 = vpop.f32.mrf.mxu0
    %v2010 = vadd.f32 %v64, %v2009
    %v2011 = vpop.f32.mrf.mxu0
    %2012 = vmatprep.mubr.bf16.mxu0 0
    %2013 = vmatmul.mubr.bf16.gmra.mxu0 %v1129
    %v2014 = vpop.f32.mrf.mxu0
    %v2015 = vadd.f32 %v65, %v2014
    %v2016 = vpop.f32.mrf.mxu0
    %v2017 = vpop.f32.mrf.mxu0
    %v2018 = vadd.f32 %v66, %v2017
    %v2019 = vpop.f32.mrf.mxu0
    %2020 = vdwg.mxu0
    %v2021 = vxor.u32 %v2007, 2147483648
    %v2022 = vxor.u32 %v2010, 2147483648
    %v2023 = vxor.u32 %v2015, 2147483648
    %v2024 = vxor.u32 %v2018, 2147483648
    %v2025 = vmul.f32 %v2021, 1.442695
    %v2026 = vpow.pop %v2025
    %v2027 = vmul.f32 %v2022, 1.442695
    %v2028 = vpow.pop %v2027
    %v2029 = vmul.f32 %v2023, 1.442695
    %v2030 = vpow.pop %v2029
    %v2031 = vmul.f32 %v2024, 1.442695
    %v2032 = vpow.pop %v2031
    %v2033 = vadd.f32 %v2026, 1.0
    %v2034 = vadd.f32 %v2028, 1.0
    %v2035 = vadd.f32 %v2030, 1.0
    %v2036 = vadd.f32 %v2032, 1.0
    %v2037 = vrcp.pop %v2033
    %v2038 = vmul.f32 1.0, %v2037
    %v2039 = vrcp.pop %v2034
    %v2040 = vmul.f32 1.0, %v2039
    %v2041 = vrcp.pop %v2035
    %v2042 = vmul.f32 1.0, %v2041
    %v2043 = vrcp.pop %v2036
    %v2044 = vmul.f32 1.0, %v2043
    %2046 = vset.pattern.permute.xlu0 0
    %2047 = vperm.xlu0 %2046, %v2038
    %v2048 = vpop.permute.xlu0 %2047
    %2051 = vset.pattern.permute.xlu0 0
    %2052 = vperm.xlu0 %2051, %v2040
    %v2053 = vpop.permute.xlu0 %2052
    %2056 = vset.pattern.permute.xlu0 0
    %2057 = vperm.xlu0 %2056, %v2042
    %v2058 = vpop.permute.xlu0 %2057
    %2061 = vset.pattern.permute.xlu0 0
    %2062 = vperm.xlu0 %2061, %v2044
    %v2063 = vpop.permute.xlu0 %2062
    %v2065 = vmul.f32 %v1901, %v2048
    %v2066 = vmul.f32 %v1902, %v2048
    %v2067 = vmul.f32 %v1903, %v2053
    %v2068 = vmul.f32 %v1904, %v2053
    %v2069 = vmul.f32 %v1905, %v2058
    %v2070 = vmul.f32 %v1906, %v2058
    %v2071 = vmul.f32 %v1907, %v2063
    %v2072 = vmul.f32 %v1908, %v2063
    %v2073 = vadd.f32 %v2065, 3.0
    %v2074 = vadd.f32 %v2066, 3.0
    %v2075 = vadd.f32 %v2067, 3.0
    %v2076 = vadd.f32 %v2068, 3.0
    %v2077 = vadd.f32 %v2069, 3.0
    %v2078 = vadd.f32 %v2070, 3.0
    %v2079 = vadd.f32 %v2071, 3.0
    %v2080 = vadd.f32 %v2072, 3.0
    %v2081 = vmax.f32 %v2073, 0.0
    %v2082 = vmax.f32 %v2074, 0.0
    %v2083 = vmax.f32 %v2075, 0.0
    %v2084 = vmax.f32 %v2076, 0.0
    %v2085 = vmax.f32 %v2077, 0.0
    %v2086 = vmax.f32 %v2078, 0.0
    %v2087 = vmax.f32 %v2079, 0.0
    %v2088 = vmax.f32 %v2080, 0.0
    %v2089 = vmin.f32 %v2081, 6.0
    %v2090 = vmin.f32 %v2082, 6.0
    %v2091 = vmin.f32 %v2083, 6.0
    %v2092 = vmin.f32 %v2084, 6.0
    %v2093 = vmin.f32 %v2085, 6.0
    %v2094 = vmin.f32 %v2086, 6.0
    %v2095 = vmin.f32 %v2087, 6.0
    %v2096 = vmin.f32 %v2088, 6.0
    %v2097 = vmul.f32 %v2065, %v2089
    %v2098 = vmul.f32 %v2066, %v2090
    %v2099 = vmul.f32 %v2067, %v2091
    %v2100 = vmul.f32 %v2068, %v2092
    %v2101 = vmul.f32 %v2069, %v2093
    %v2102 = vmul.f32 %v2070, %v2094
    %v2103 = vmul.f32 %v2071, %v2095
    %v2104 = vmul.f32 %v2072, %v2096
    %v2105 = vmul.f32 %v2097, 0.16666667
    %v2106 = vmul.f32 %v2098, 0.16666667
    %v2107 = vmul.f32 %v2099, 0.16666667
    %v2108 = vmul.f32 %v2100, 0.16666667
    %v2109 = vmul.f32 %v2101, 0.16666667
    %v2110 = vmul.f32 %v2102, 0.16666667
    %v2111 = vmul.f32 %v2103, 0.16666667
    %v2112 = vmul.f32 %v2104, 0.16666667
    %v2113 = vpack.c.bf16 %v2107, %v2105
    %v2114 = vpack.c.bf16 %v2108, %v2106
    %v2115 = vpack.c.bf16 %v2111, %v2109
    %v2116 = vpack.c.bf16 %v2112, %v2110
    %2117 = vmatprep.subr.bf16.mxu0 0
    %2118 = vmatpush1.bf16.msra.mxu0 0
    %2119 = vmatprep.subr.bf16.mxu0 0
    %2120 = vmatpush1.bf16.msra.mxu0 0
    %2121 = vmatprep.subr.bf16.mxu0 0
    %2122 = vmatpush1.bf16.msra.mxu0 0
    %2123 = vmatprep.subr.bf16.mxu0 0
    %2124 = vmatpush1.bf16.msra.mxu0 0
    %2125 = vmatprep.subr.bf16.mxu0 0
    %2126 = vmatpush1.bf16.msra.mxu0 0
    %2127 = vmatprep.subr.bf16.mxu0 0
    %2128 = vmatpush1.bf16.msra.mxu0 0
    %2129 = vmatprep.subr.bf16.mxu0 %v2116
    %2130 = vmatpush1.bf16.msra.mxu0 %v2115
    %2131 = vmatprep.subr.bf16.mxu0 %v2114
    %2132 = vmatpush1.bf16.msra.mxu0 %v2113
    %2133 = vmatprep.subr.bf16.mxu0 0
    %2134 = vmatpush2.bf16.msra.mxu0 0
    %2135 = vmatprep.subr.bf16.mxu0 0
    %2136 = vmatpush2.bf16.msra.mxu0 0
    %2137 = vmatprep.subr.bf16.mxu0 0
    %2138 = vmatpush2.bf16.msra.mxu0 0
    %2139 = vmatprep.subr.bf16.mxu0 0
    %2140 = vmatpush2.bf16.msra.mxu0 0
    %2141 = vmatprep.subr.bf16.mxu0 0
    %2142 = vmatpush2.bf16.msra.mxu0 0
    %2143 = vmatprep.subr.bf16.mxu0 0
    %2144 = vmatpush2.bf16.msra.mxu0 0
    %2145 = vmatprep.subr.bf16.mxu0 0
    %2146 = vmatpush2.bf16.msra.mxu0 0
    %2147 = vmatprep.subr.bf16.mxu0 0
    %2148 = vmatpush2.bf16.msra.mxu0 0
    %2149 = vmatprep.mubr.bf16.mxu0 0
    %2150 = vmatmul.mubr.bf16.gmra.mxu0 %v1286
    %v2151 = vpop.f32.mrf.mxu0
    %v2152 = vadd.f32 0.0, %v2151
    %v2153 = vpop.f32.mrf.mxu0
    %v2154 = vadd.f32 0.0, %v2153
    %v2155 = vpop.f32.mrf.mxu0
    %v2156 = vadd.f32 0.0, %v2155
    %v2157 = vpop.f32.mrf.mxu0
    %v2158 = vadd.f32 0.0, %v2157
    %2159 = vdwg.mxu0
    %v2160 = vmul.f32 %v2152, %v1334
    %v2161 = vmul.f32 %v2154, %v1334
    %v2162 = vmul.f32 %v2156, %v1339
    %v2163 = vmul.f32 %v2158, %v1339
    %v2164 = vadd.f32 %v2160, %v1348
    %v2165 = vadd.f32 %v2161, %v1348
    %v2166 = vadd.f32 %v2162, %v1353
    %v2167 = vadd.f32 %v2163, %v1353
    %v2168 = vunpack.c.l.bf16 %v1372
    %v2169 = vunpack.c.h.bf16 %v1372
    %v2170 = vunpack.c.l.bf16 %v1373
    %v2171 = vunpack.c.h.bf16 %v1373
    %v2172 = vadd.f32 %v2164, %v2168
    %v2173 = vadd.f32 %v2165, %v2169
    %v2174 = vadd.f32 %v2166, %v2170
    %v2175 = vadd.f32 %v2167, %v2171
    %s2176 = scalar_lea.vmem [#allocation2], 32
    %2177 = vst [vmem:[%s2176] sm:$0xff] %v2172
    %2178 = vst [vmem:[%s2176 + $0x8] sm:$0xff] %v2173
    %2179 = vst [vmem:[%s2176 + $0x10] sm:$0xff] %v2174
    %2180 = vst [vmem:[%s2176 + $0x18] sm:$0xff] %v2175
    // Predicated region
    $region42: #{tpu_custom_call.1} parent=1 // pred_check
      _
    $region43: #{tpu_custom_call.1} parent=1 // pred_check_branch
      %2182 = sbr.rel (0) target = $region45
    $region44: #{tpu_custom_call.1} parent=1 // pred_region
      %s2184 = ssub.s32 1024, 1024
      %2185 = vsyncadd [#allocation3], %s2184
      %s2186 = sshll.u32 [#allocation2], 4
      %s2187 = int_to_ptr.vmem [resolvable:$true] %s2186
      %2192 = dma.vmem_to_hbm [thread:$0]  %s2187, 1024, %s10, [#allocation3], 256, 256, 16
    $region45: #{tpu_custom_call.1} parent=1 // pred_fallthru
      _
    // Predicated region
    $region46: #{tpu_custom_call.1} parent=1 // pred_check
      _
    $region47: #{tpu_custom_call.1} parent=1 // pred_check_branch
      %2194 = sbr.rel (0) target = $region49
    $region48: #{tpu_custom_call.1} parent=1 // pred_region
      %2195 = dma.done [#allocation3], 1024
    $region49: #{tpu_custom_call.1} parent=1 // pred_fallthru
      _
    %2196 = vsyncpa [#allocation3], 1

</llo_original>
